<compile_context>
chip_gen: v7x
topology: tpu7x:2x2x1
jax: 0.10.0
libtpu: 0.0.40
codegen_flags: <defaults>
</compile_context>

<pallas_src>
import functools

import jax
import jax.numpy as jnp
from jax.experimental import pallas as pl
from jax.experimental.pallas import tpu as pltpu

LANE = 128
SUBLANE = 8


def _round_up(n, m):
    return ((n + m - 1) // m) * m


# ------------------------------ kernel body ----------------------------------

def invertible_nn_kernel(
    d,                     # static (bound via functools.partial)
    # --- refs: one packed batch tile + resident fused weights ---
    x_ref,                 # (tb, 2d) f32   packed [x1 | x2]
    enc_w1x, enc_w2,       # (128,128) bf16 (enc_w1 at rows 0:d)
    nn_w1x, nn_w1b,        # (128,128) bf16
    nn_w2,                 # (128,128) bf16
    qk_w,                  # (128,512) bf16  cols [s_q | t_q | s_k | t_k]
    st_nw,                 # (256,256) bf16  block-diag [[s_nw,0],[0,t_nw]]
    st_ow,                 # (256,256) bf16  block-diag, payload cols at d:2d
    bias,                  # (8, 512) f32    packed biases
    out_ref,               # (tb, 2d) f32    cat(x1, y2)
    xw_ref,                # VMEM scratch (tb, 128) f32
):
    P = LANE

    # Widen packed (tb, 2d) input to a zero-padded (tb, 128) working tile.
    # Padding lanes are zeroed once (scratch persists across grid steps).
    @pl.when(pl.program_id(0) == 0)
    def _init():
        xw_ref[...] = jnp.zeros_like(xw_ref)

    xw_ref[:, 0:2 * d] = x_ref[...].astype(jnp.float32)
    x_full = xw_ref[...]                       # (tb, 128): [x1 | x2 | 0...]

    def mm(a, w_ref):
        # bf16 MXU matmul, f32 accumulate.
        return jnp.dot(a.astype(jnp.bfloat16), w_ref[...],
                       preferred_element_type=jnp.float32)

    # Packed biases (static slices, f32).
    b_enc1 = bias[0:1, 0:P]
    b_enc2 = bias[1:2, 0:P]
    b_nn1 = bias[2:3, 0:P]
    b_nn2 = bias[3:4, 0:P]
    b_qk = bias[4:5, 0:4 * P]
    b_stn = bias[5:6, 0:2 * P]
    b_sto = bias[6:7, 0:2 * P]

    # Encoder: Linear -> ReLU -> Linear (x1 selected by zeroed x2 rows of enc_w1x).
    h = jax.nn.relu(mm(x_full, enc_w1x) + b_enc1)
    encoded = mm(h, enc_w2) + b_enc2                    # (tb, 128)

    # SimpleNN on cat(x1, encoded): concat replaced by split weights.
    h2 = jax.nn.relu(mm(x_full, nn_w1x) + mm(encoded, nn_w1b) + b_nn1)
    v = mm(h2, nn_w2) + b_nn2                           # nn_output, (tb, 128) f32

    # Fused attention blocks s & t.
    qk = jax.nn.relu(mm(v, qk_w) + b_qk)                # (tb, 512): [s_q|t_q|s_k|t_k]
    attn_w = jax.nn.sigmoid(qk[:, 0:2 * P] + qk[:, 2 * P:4 * P])   # [s_attn|t_attn]
    v2 = jnp.concatenate([v, v], axis=-1)               # (tb, 256)
    out2 = attn_w * v2
    w2 = jax.nn.sigmoid(jax.nn.relu(mm(out2, st_nw) + b_stn))
    f2 = v2 + w2 * out2
    st = mm(f2, st_ow) + b_sto                          # payload cols d:2d per half
    s_out = st[:, 0:P]
    t_out = st[:, P:2 * P]

    # cat(x1, y2) in one elementwise op: s_out/t_out are zero on the x1 lanes,
    # so exp(0)=1 passes x1 through unchanged; lanes d:2d get x2*exp(s)+t.
    y_full = x_full * jnp.exp(s_out) + t_out
    out_ref[...] = y_full[:, 0:2 * d].astype(out_ref.dtype)


# ------------------------------ parameters ------------------------------------

def make_params(key, input_dim, hidden_dim, encoder_hidden_dim):
    """Logical parameters (PyTorch-style init). Weights (in, out); biases (1, out)."""
    d = input_dim - 1
    io = d + encoder_hidden_dim

    def lin(key, fan_in, fan_out):
        kw, kb = jax.random.split(key)
        bound = 1.0 / jnp.sqrt(fan_in)
        w = jax.random.uniform(kw, (fan_in, fan_out), jnp.float32, -bound, bound)
        b = jax.random.uniform(kb, (1, fan_out), jnp.float32, -bound, bound)
        return w, b

    keys = jax.random.split(key, 12)
    p = {}
    p["enc_w1"], p["enc_b1"] = lin(keys[0], d, hidden_dim)
    p["enc_w2"], p["enc_b2"] = lin(keys[1], hidden_dim, encoder_hidden_dim)
    p["nn_w1"], p["nn_b1"] = lin(keys[2], io, hidden_dim)
    p["nn_w2"], p["nn_b2"] = lin(keys[3], hidden_dim, io)
    p["s_qw"], p["s_qb"] = lin(keys[4], io, io)
    p["s_kw"], p["s_kb"] = lin(keys[5], io, io)
    p["s_nw"], p["s_nb"] = lin(keys[6], io, io)
    p["s_ow"], p["s_ob"] = lin(keys[7], io, d)
    p["t_qw"], p["t_qb"] = lin(keys[8], io, io)
    p["t_kw"], p["t_kb"] = lin(keys[9], io, io)
    p["t_nw"], p["t_nb"] = lin(keys[10], io, io)
    p["t_ow"], p["t_ob"] = lin(keys[11], io, d)
    return p


_W_ORDER = ["enc_w1x", "enc_w2", "nn_w1x", "nn_w1b", "nn_w2",
            "qk_w", "st_nw", "st_ow", "bias"]


def prepare_padded_params(params, *, d, enc_dim, hidden_dim):
    """One-time layout work: zero-pad/fuse weights (bf16) and pack biases (f32).

    Zero padding keeps the math exact: every padded output column stays zero
    through the relu/sigmoid-gated products, and the zeroed x2-rows of
    enc_w1x / nn_w1x make the packed-input matmuls pick out x1."""
    P = LANE
    io = d + enc_dim
    assert max(2 * d, enc_dim, hidden_dim, io) <= P, "dims must fit one 128-lane block"

    def padw(w, rows, cols, ro=0, co=0):
        out = jnp.zeros((rows, cols), jnp.float32)
        return out.at[ro:ro + w.shape[0], co:co + w.shape[1]].set(w)

    p = {}
    # x-packed first layers: x1 rows at 0:d, x2 rows (d:2d) stay zero.
    p["enc_w1x"] = padw(params["enc_w1"], P, P)
    p["enc_w2"] = padw(params["enc_w2"], P, P)
    p["nn_w1x"] = padw(params["nn_w1"][:d, :], P, P)
    p["nn_w1b"] = padw(params["nn_w1"][d:, :], P, P)
    p["nn_w2"] = padw(params["nn_w2"], P, P)
    # Fused q/k projection, columns [s_q | t_q | s_k | t_k].
    p["qk_w"] = jnp.concatenate(
        [padw(params["s_qw"], P, P), padw(params["t_qw"], P, P),
         padw(params["s_kw"], P, P), padw(params["t_kw"], P, P)], axis=1)
    # Block-diagonal fused nnout: [[s_nw, 0], [0, t_nw]].
    st_nw = jnp.zeros((2 * P, 2 * P), jnp.float32)
    st_nw = st_nw.at[:io, :io].set(params["s_nw"])
    st_nw = st_nw.at[P:P + io, P:P + io].set(params["t_nw"])
    p["st_nw"] = st_nw
    # Block-diagonal fused output_linear; payload columns at d:2d of each half
    # so the final elementwise lands y2 on the x2 lanes (x1 passthrough free).
    st_ow = jnp.zeros((2 * P, 2 * P), jnp.float32)
    st_ow = st_ow.at[:io, d:2 * d].set(params["s_ow"])
    st_ow = st_ow.at[P:P + io, P + d:P + 2 * d].set(params["t_ow"])
    p["st_ow"] = st_ow
    p = {k: v.astype(jnp.bfloat16) for k, v in p.items()}

    # Bias pack: one (8, 512) f32 operand, read with static slices in-kernel.
    bias = jnp.zeros((8, 4 * P), jnp.float32)
    bias = bias.at[0, :hidden_dim].set(params["enc_b1"][0])
    bias = bias.at[1, :enc_dim].set(params["enc_b2"][0])
    bias = bias.at[2, :hidden_dim].set(params["nn_b1"][0])
    bias = bias.at[3, :io].set(params["nn_b2"][0])
    bias = bias.at[4, 0 * P:0 * P + io].set(params["s_qb"][0])
    bias = bias.at[4, 1 * P:1 * P + io].set(params["t_qb"][0])
    bias = bias.at[4, 2 * P:2 * P + io].set(params["s_kb"][0])
    bias = bias.at[4, 3 * P:3 * P + io].set(params["t_kb"][0])
    bias = bias.at[5, :io].set(params["s_nb"][0])
    bias = bias.at[5, P:P + io].set(params["t_nb"][0])
    bias = bias.at[6, d:2 * d].set(params["s_ob"][0])
    bias = bias.at[6, P + d:P + 2 * d].set(params["t_ob"][0])
    p["bias"] = bias
    return p


# -------------------------------- wrapper --------------------------------------

@functools.partial(jax.jit, static_argnames=("d", "block_b"))
def invertible_nn_forward(x, padded_params, *, d, block_b=1024):
    """x: (B, 2*d) f32.  Returns cat(x1, y2): (B, 2*d) f32."""
    B = x.shape[0]
    assert x.shape[1] == 2 * d, "x must have 2*(input_dim-1) feature columns"

    # Batch tile: multiple of 8 sublanes.  block_b=1024 keeps live intermediates
    # (dominated by the (tb, 512) qk tensor) well inside v7x's 64 MiB VMEM and
    # within the 48 MiB scoped limit requested below; raise to 2-4K on v6e.
    tb = min(block_b, _round_up(B, SUBLANE))
    b_pad = _round_up(B, tb)
    grid = (b_pad // tb,)

    # Only the batch dim is padded; the feature dim stays at its logical 2*d
    # (widening to 128 lanes happens inside the kernel, in VMEM).
    xp = x if b_pad == B else jnp.pad(x, ((0, b_pad - B), (0, 0)))

    weights = [padded_params[k] for k in _W_ORDER]

    io_spec = pl.BlockSpec((tb, 2 * d), lambda i: (i, 0))
    weight_specs = [pl.BlockSpec(w.shape, lambda i: (0, 0)) for w in weights]

    # Advisory cost estimate for XLA scheduling of the surrounding ops.
    P = LANE
    flops = 2 * b_pad * (17 * P * P)                 # 5x(PxP) + Px4P + 2x(2Px2P)
    transcendentals = b_pad * (5 * P)                # two sigmoids on 2P + exp on P
    weight_bytes = sum(int(w.size) * w.dtype.itemsize for w in weights)
    bytes_accessed = 4 * (2 * b_pad * 2 * d) + weight_bytes
    cost = pl.CostEstimate(flops=int(flops),
                           transcendentals=int(transcendentals),
                           bytes_accessed=int(bytes_accessed))

    kernel = functools.partial(invertible_nn_kernel, d)

    y = pl.pallas_call(
        kernel,
        out_shape=jax.ShapeDtypeStruct((b_pad, 2 * d), jnp.float32),
        grid=grid,
        in_specs=[io_spec] + weight_specs,
        out_specs=io_spec,
        scratch_shapes=[pltpu.VMEM((tb, LANE), jnp.float32)],
        compiler_params=pltpu.CompilerParams(
            dimension_semantics=("parallel",),
            vmem_limit_bytes=48 * 1024 * 1024),
        cost_estimate=cost,
    )(xp, *weights)

    return y if b_pad == B else y[:B]


# ---------------------------- plain-JAX reference ------------------------------

def _ref_forward(x, p, d):
    def linear(v, w, b):
        return v @ w + b

    def attn(v, qw, qb, kw, kb, nw, nb, ow, ob):
        q = jax.nn.relu(linear(v, qw, qb))
        k = jax.nn.relu(linear(v, kw, kb))
        w1 = jax.nn.sigmoid(q + k)
        out = w1 * v
        w2 = jax.nn.sigmoid(jax.nn.relu(linear(out, nw, nb)))
        f2 = v + w2 * out
        return linear(f2, ow, ob)

    x1, x2 = x[:, :d], x[:, d:]
    h = jax.nn.relu(linear(x1, p["enc_w1"], p["enc_b1"]))
    enc = linear(h, p["enc_w2"], p["enc_b2"])
    nn_in = jnp.concatenate([x1, enc], axis=-1)
    h2 = jax.nn.relu(linear(nn_in, p["nn_w1"], p["nn_b1"]))
    nn_out = linear(h2, p["nn_w2"], p["nn_b2"])
    s = attn(nn_out, p["s_qw"], p["s_qb"], p["s_kw"], p["s_kb"],
             p["s_nw"], p["s_nb"], p["s_ow"], p["s_ob"])
    t = attn(nn_out, p["t_qw"], p["t_qb"], p["t_kw"], p["t_kb"],
             p["t_nw"], p["t_nb"], p["t_ow"], p["t_ob"])
    y2 = x2 * jnp.exp(s) + t
    return jnp.concatenate([x1, y2], axis=-1)


# ---------------------------------- main ----------------------------------------

if __name__ == "__main__":
    # Shapes consistent with the module: input_dim=5 -> d=4, encoder_hidden_dim=8
    # -> io_dim=12, hidden_dim=32, batch=2, x: (2, 8).
    INPUT_DIM = 5
    HIDDEN_DIM = 32
    ENCODER_HIDDEN_DIM = 8
    B = 2
    d = INPUT_DIM - 1

    key = jax.random.PRNGKey(0)
    kx, kp = jax.random.split(key)
    x = jax.random.normal(kx, (B, 2 * d), dtype=jnp.float32)

    params = make_params(kp, INPUT_DIM, HIDDEN_DIM, ENCODER_HIDDEN_DIM)
    padded = prepare_padded_params(params, d=d, enc_dim=ENCODER_HIDDEN_DIM,
                                   hidden_dim=HIDDEN_DIM)

    out = invertible_nn_forward(x, padded, d=d)
    out = jax.block_until_ready(out)

    ref = _ref_forward(x, params, d)
    assert out.shape == (B, 2 * d)
    # bf16 weights / matmul inputs: loosened tolerance vs. the f32 reference
    # (per review note). x1 passthrough is exact; y2 carries ~1e-2 bf16 error.
    assert jnp.allclose(out, ref, atol=3e-2, rtol=3e-2), \
        "Pallas kernel mismatch vs reference"

    print("KERNEL_OK")
</pallas_src>

<mosaic_0001>
module attributes {stable_mosaic.version = 11 : i64} {
  func.func @invertible_nn_kernel(%arg0: i32, %arg1: memref<8x8xf32, #tpu.memory_space<vmem>>, %arg2: memref<128x128xbf16, #tpu.memory_space<vmem>>, %arg3: memref<128x128xbf16, #tpu.memory_space<vmem>>, %arg4: memref<128x128xbf16, #tpu.memory_space<vmem>>, %arg5: memref<128x128xbf16, #tpu.memory_space<vmem>>, %arg6: memref<128x128xbf16, #tpu.memory_space<vmem>>, %arg7: memref<128x512xbf16, #tpu.memory_space<vmem>>, %arg8: memref<256x256xbf16, #tpu.memory_space<vmem>>, %arg9: memref<256x256xbf16, #tpu.memory_space<vmem>>, %arg10: memref<8x512xf32, #tpu.memory_space<vmem>>, %arg11: memref<8x8xf32, #tpu.memory_space<vmem>>, %arg12: memref<8x128xf32, #tpu.memory_space<vmem>>) attributes {dimension_semantics = [#tpu.dimension_semantics<parallel>], iteration_bounds = array<i64: 1>, scalar_prefetch = 0 : i64, scratch_operands = 1 : i64, tpu.core_type = #tpu.core_type<tc>, window_params = [{transform_indices = @transform_0, window_bounds = array<i64: 8, 8>}, {pipeline_mode = #tpu.pipeline_mode<synchronous>, transform_indices = @transform_1, window_bounds = array<i64: 128, 128>}, {pipeline_mode = #tpu.pipeline_mode<synchronous>, transform_indices = @transform_2, window_bounds = array<i64: 128, 128>}, {pipeline_mode = #tpu.pipeline_mode<synchronous>, transform_indices = @transform_3, window_bounds = array<i64: 128, 128>}, {pipeline_mode = #tpu.pipeline_mode<synchronous>, transform_indices = @transform_4, window_bounds = array<i64: 128, 128>}, {pipeline_mode = #tpu.pipeline_mode<synchronous>, transform_indices = @transform_5, window_bounds = array<i64: 128, 128>}, {pipeline_mode = #tpu.pipeline_mode<synchronous>, transform_indices = @transform_6, window_bounds = array<i64: 128, 512>}, {pipeline_mode = #tpu.pipeline_mode<synchronous>, transform_indices = @transform_7, window_bounds = array<i64: 256, 256>}, {pipeline_mode = #tpu.pipeline_mode<synchronous>, transform_indices = @transform_8, window_bounds = array<i64: 256, 256>}, {pipeline_mode = #tpu.pipeline_mode<synchronous>, transform_indices = @transform_9, window_bounds = array<i64: 8, 512>}, {transform_indices = @transform_10, window_bounds = array<i64: 8, 8>}]} {
    %c0_i32 = arith.constant 0 : i32
    %0 = arith.cmpi eq, %arg0, %c0_i32 : i32
    %1 = arith.extui %0 : i1 to i32
    %c0_i32_0 = arith.constant 0 : i32
    %2 = arith.cmpi ne, %1, %c0_i32_0 : i32
    scf.if %2 {
      %cst_45 = arith.constant 0.000000e+00 : f32
      %84 = vector.broadcast %cst_45 : f32 to vector<8x128xf32>
      %c0_46 = arith.constant 0 : index
      %c0_47 = arith.constant 0 : index
      %85 = vector.load %arg12[%c0_46, %c0_47] : memref<8x128xf32, #tpu.memory_space<vmem>>, vector<8x128xf32>
      tpu.vector_store %arg12[%c0_46, %c0_47], %84 {strides = array<i32>} : memref<8x128xf32, #tpu.memory_space<vmem>>, vector<8x128xf32>,
    } else {
    }
    %c0 = arith.constant 0 : index
    %c0_1 = arith.constant 0 : index
    %3 = vector.load %arg1[%c0, %c0_1] : memref<8x8xf32, #tpu.memory_space<vmem>>, vector<8x8xf32>
    %c0_2 = arith.constant 0 : index
    %c0_3 = arith.constant 0 : index
    %4 = vector.load %arg12[%c0_2, %c0_3] : memref<8x128xf32, #tpu.memory_space<vmem>>, vector<8x8xf32>
    tpu.vector_store %arg12[%c0_2, %c0_3], %3 {strides = array<i32>} : memref<8x128xf32, #tpu.memory_space<vmem>>, vector<8x8xf32>,
    %c0_4 = arith.constant 0 : index
    %c0_5 = arith.constant 0 : index
    %5 = vector.load %arg12[%c0_4, %c0_5] : memref<8x128xf32, #tpu.memory_space<vmem>>, vector<8x128xf32>
    %c0_6 = arith.constant 0 : index
    %c0_7 = arith.constant 0 : index
    %6 = vector.load %arg10[%c0_6, %c0_7] : memref<8x512xf32, #tpu.memory_space<vmem>>, vector<1x128xf32>
    %c1 = arith.constant 1 : index
    %c0_8 = arith.constant 0 : index
    %7 = vector.load %arg10[%c1, %c0_8] : memref<8x512xf32, #tpu.memory_space<vmem>>, vector<1x128xf32>
    %c2 = arith.constant 2 : index
    %c0_9 = arith.constant 0 : index
    %8 = vector.load %arg10[%c2, %c0_9] : memref<8x512xf32, #tpu.memory_space<vmem>>, vector<1x128xf32>
    %c3 = arith.constant 3 : index
    %c0_10 = arith.constant 0 : index
    %9 = vector.load %arg10[%c3, %c0_10] : memref<8x512xf32, #tpu.memory_space<vmem>>, vector<1x128xf32>
    %c4 = arith.constant 4 : index
    %c0_11 = arith.constant 0 : index
    %10 = vector.load %arg10[%c4, %c0_11] : memref<8x512xf32, #tpu.memory_space<vmem>>, vector<1x512xf32>
    %c5 = arith.constant 5 : index
    %c0_12 = arith.constant 0 : index
    %11 = vector.load %arg10[%c5, %c0_12] : memref<8x512xf32, #tpu.memory_space<vmem>>, vector<1x256xf32>
    %c6 = arith.constant 6 : index
    %c0_13 = arith.constant 0 : index
    %12 = vector.load %arg10[%c6, %c0_13] : memref<8x512xf32, #tpu.memory_space<vmem>>, vector<1x256xf32>
    %13 = arith.truncf %5 : vector<8x128xf32> to vector<8x128xbf16>
    %c0_14 = arith.constant 0 : index
    %c0_15 = arith.constant 0 : index
    %14 = vector.load %arg2[%c0_14, %c0_15] : memref<128x128xbf16, #tpu.memory_space<vmem>>, vector<128x128xbf16>
    %cst = arith.constant dense<0.000000e+00> : vector<8x128xf32>
    %15 = tpu.matmul %13, %14, %cst {dimension_numbers = #tpu.dot_dimension_numbers<[1], [0], [0], [1], [0, 0, 1, 1], [], []>} : vector<8x128xbf16>, vector<128x128xbf16>, vector<8x128xf32> -> vector<8x128xf32>
    %16 = vector.broadcast %6 : vector<1x128xf32> to vector<8x128xf32>
    %17 = arith.addf %15, %16 : vector<8x128xf32>
    %cst_16 = arith.constant 0.000000e+00 : f32
    %18 = vector.broadcast %cst_16 : f32 to vector<8x128xf32>
    %19 = arith.maximumf %17, %18 : vector<8x128xf32>
    %20 = arith.truncf %19 : vector<8x128xf32> to vector<8x128xbf16>
    %c0_17 = arith.constant 0 : index
    %c0_18 = arith.constant 0 : index
    %21 = vector.load %arg3[%c0_17, %c0_18] : memref<128x128xbf16, #tpu.memory_space<vmem>>, vector<128x128xbf16>
    %cst_19 = arith.constant dense<0.000000e+00> : vector<8x128xf32>
    %22 = tpu.matmul %20, %21, %cst_19 {dimension_numbers = #tpu.dot_dimension_numbers<[1], [0], [0], [1], [0, 0, 1, 1], [], []>} : vector<8x128xbf16>, vector<128x128xbf16>, vector<8x128xf32> -> vector<8x128xf32>
    %23 = vector.broadcast %7 : vector<1x128xf32> to vector<8x128xf32>
    %24 = arith.addf %22, %23 : vector<8x128xf32>
    %25 = arith.truncf %5 : vector<8x128xf32> to vector<8x128xbf16>
    %c0_20 = arith.constant 0 : index
    %c0_21 = arith.constant 0 : index
    %26 = vector.load %arg4[%c0_20, %c0_21] : memref<128x128xbf16, #tpu.memory_space<vmem>>, vector<128x128xbf16>
    %cst_22 = arith.constant dense<0.000000e+00> : vector<8x128xf32>
    %27 = tpu.matmul %25, %26, %cst_22 {dimension_numbers = #tpu.dot_dimension_numbers<[1], [0], [0], [1], [0, 0, 1, 1], [], []>} : vector<8x128xbf16>, vector<128x128xbf16>, vector<8x128xf32> -> vector<8x128xf32>
    %28 = arith.truncf %24 : vector<8x128xf32> to vector<8x128xbf16>
    %c0_23 = arith.constant 0 : index
    %c0_24 = arith.constant 0 : index
    %29 = vector.load %arg5[%c0_23, %c0_24] : memref<128x128xbf16, #tpu.memory_space<vmem>>, vector<128x128xbf16>
    %cst_25 = arith.constant dense<0.000000e+00> : vector<8x128xf32>
    %30 = tpu.matmul %28, %29, %cst_25 {dimension_numbers = #tpu.dot_dimension_numbers<[1], [0], [0], [1], [0, 0, 1, 1], [], []>} : vector<8x128xbf16>, vector<128x128xbf16>, vector<8x128xf32> -> vector<8x128xf32>
    %31 = arith.addf %27, %30 : vector<8x128xf32>
    %32 = vector.broadcast %8 : vector<1x128xf32> to vector<8x128xf32>
    %33 = arith.addf %31, %32 : vector<8x128xf32>
    %cst_26 = arith.constant 0.000000e+00 : f32
    %34 = vector.broadcast %cst_26 : f32 to vector<8x128xf32>
    %35 = arith.maximumf %33, %34 : vector<8x128xf32>
    %36 = arith.truncf %35 : vector<8x128xf32> to vector<8x128xbf16>
    %c0_27 = arith.constant 0 : index
    %c0_28 = arith.constant 0 : index
    %37 = vector.load %arg6[%c0_27, %c0_28] : memref<128x128xbf16, #tpu.memory_space<vmem>>, vector<128x128xbf16>
    %cst_29 = arith.constant dense<0.000000e+00> : vector<8x128xf32>
    %38 = tpu.matmul %36, %37, %cst_29 {dimension_numbers = #tpu.dot_dimension_numbers<[1], [0], [0], [1], [0, 0, 1, 1], [], []>} : vector<8x128xbf16>, vector<128x128xbf16>, vector<8x128xf32> -> vector<8x128xf32>
    %39 = vector.broadcast %9 : vector<1x128xf32> to vector<8x128xf32>
    %40 = arith.addf %38, %39 : vector<8x128xf32>
    %41 = arith.truncf %40 : vector<8x128xf32> to vector<8x128xbf16>
    %c0_30 = arith.constant 0 : index
    %c0_31 = arith.constant 0 : index
    %42 = vector.load %arg7[%c0_30, %c0_31] : memref<128x512xbf16, #tpu.memory_space<vmem>>, vector<128x512xbf16>
    %cst_32 = arith.constant dense<0.000000e+00> : vector<8x512xf32>
    %43 = tpu.matmul %41, %42, %cst_32 {dimension_numbers = #tpu.dot_dimension_numbers<[1], [0], [0], [1], [0, 0, 1, 1], [], []>} : vector<8x128xbf16>, vector<128x512xbf16>, vector<8x512xf32> -> vector<8x512xf32>
    %44 = vector.broadcast %10 : vector<1x512xf32> to vector<8x512xf32>
    %45 = arith.addf %43, %44 : vector<8x512xf32>
    %cst_33 = arith.constant 0.000000e+00 : f32
    %46 = vector.broadcast %cst_33 : f32 to vector<8x512xf32>
    %47 = arith.maximumf %45, %46 : vector<8x512xf32>
    %48 = vector.extract_strided_slice %47 {offsets = [0, 0], sizes = [8, 256], strides = [1, 1]} : vector<8x512xf32> to vector<8x256xf32>
    %49 = vector.extract_strided_slice %47 {offsets = [0, 256], sizes = [8, 256], strides = [1, 1]} : vector<8x512xf32> to vector<8x256xf32>
    %50 = arith.addf %48, %49 : vector<8x256xf32>
    %51 = arith.negf %50 : vector<8x256xf32>
    %52 = math.exp %51 : vector<8x256xf32>
    %cst_34 = arith.constant 1.000000e+00 : f32
    %53 = vector.broadcast %cst_34 : f32 to vector<8x256xf32>
    %54 = arith.addf %53, %52 : vector<8x256xf32>
    %55 = arith.divf %53, %54 : vector<8x256xf32>
    %56 = tpu.concatenate %40, %40 in 1 : vector<8x128xf32>, vector<8x128xf32> -> vector<8x256xf32>
    %57 = arith.mulf %55, %56 : vector<8x256xf32>
    %58 = arith.truncf %57 : vector<8x256xf32> to vector<8x256xbf16>
    %c0_35 = arith.constant 0 : index
    %c0_36 = arith.constant 0 : index
    %59 = vector.load %arg8[%c0_35, %c0_36] : memref<256x256xbf16, #tpu.memory_space<vmem>>, vector<256x256xbf16>
    %cst_37 = arith.constant dense<0.000000e+00> : vector<8x256xf32>
    %60 = tpu.matmul %58, %59, %cst_37 {dimension_numbers = #tpu.dot_dimension_numbers<[1], [0], [0], [1], [0, 0, 1, 1], [], []>} : vector<8x256xbf16>, vector<256x256xbf16>, vector<8x256xf32> -> vector<8x256xf32>
    %61 = vector.broadcast %11 : vector<1x256xf32> to vector<8x256xf32>
    %62 = arith.addf %60, %61 : vector<8x256xf32>
    %cst_38 = arith.constant 0.000000e+00 : f32
    %63 = vector.broadcast %cst_38 : f32 to vector<8x256xf32>
    %64 = arith.maximumf %62, %63 : vector<8x256xf32>
    %65 = arith.negf %64 : vector<8x256xf32>
    %66 = math.exp %65 : vector<8x256xf32>
    %cst_39 = arith.constant 1.000000e+00 : f32
    %67 = vector.broadcast %cst_39 : f32 to vector<8x256xf32>
    %68 = arith.addf %67, %66 : vector<8x256xf32>
    %69 = arith.divf %67, %68 : vector<8x256xf32>
    %70 = arith.mulf %69, %57 : vector<8x256xf32>
    %71 = arith.addf %56, %70 : vector<8x256xf32>
    %72 = arith.truncf %71 : vector<8x256xf32> to vector<8x256xbf16>
    %c0_40 = arith.constant 0 : index
    %c0_41 = arith.constant 0 : index
    %73 = vector.load %arg9[%c0_40, %c0_41] : memref<256x256xbf16, #tpu.memory_space<vmem>>, vector<256x256xbf16>
    %cst_42 = arith.constant dense<0.000000e+00> : vector<8x256xf32>
    %74 = tpu.matmul %72, %73, %cst_42 {dimension_numbers = #tpu.dot_dimension_numbers<[1], [0], [0], [1], [0, 0, 1, 1], [], []>} : vector<8x256xbf16>, vector<256x256xbf16>, vector<8x256xf32> -> vector<8x256xf32>
    %75 = vector.broadcast %12 : vector<1x256xf32> to vector<8x256xf32>
    %76 = arith.addf %74, %75 : vector<8x256xf32>
    %77 = vector.extract_strided_slice %76 {offsets = [0, 0], sizes = [8, 128], strides = [1, 1]} : vector<8x256xf32> to vector<8x128xf32>
    %78 = vector.extract_strided_slice %76 {offsets = [0, 128], sizes = [8, 128], strides = [1, 1]} : vector<8x256xf32> to vector<8x128xf32>
    %79 = math.exp %77 : vector<8x128xf32>
    %80 = arith.mulf %5, %79 : vector<8x128xf32>
    %81 = arith.addf %80, %78 : vector<8x128xf32>
    %82 = vector.extract_strided_slice %81 {offsets = [0, 0], sizes = [8, 8], strides = [1, 1]} : vector<8x128xf32> to vector<8x8xf32>
    %c0_43 = arith.constant 0 : index
    %c0_44 = arith.constant 0 : index
    %83 = vector.load %arg11[%c0_43, %c0_44] : memref<8x8xf32, #tpu.memory_space<vmem>>, vector<8x8xf32>
    tpu.vector_store %arg11[%c0_43, %c0_44], %82 {strides = array<i32>} : memref<8x8xf32, #tpu.memory_space<vmem>>, vector<8x8xf32>,
    return
  }
  func.func @transform_0(%arg0: i32) -> (i32, i32) {
    %c0_i32 = arith.constant 0 : i32
    %c0_i32_0 = arith.constant 0 : i32
    return %arg0, %c0_i32 : i32, i32
  }
  func.func @transform_1(%arg0: i32) -> (i32, i32) {
    %c0_i32 = arith.constant 0 : i32
    %c0_i32_0 = arith.constant 0 : i32
    %c0_i32_1 = arith.constant 0 : i32
    return %c0_i32, %c0_i32_0 : i32, i32
  }
  func.func @transform_2(%arg0: i32) -> (i32, i32) {
    %c0_i32 = arith.constant 0 : i32
    %c0_i32_0 = arith.constant 0 : i32
    %c0_i32_1 = arith.constant 0 : i32
    return %c0_i32, %c0_i32_0 : i32, i32
  }
  func.func @transform_3(%arg0: i32) -> (i32, i32) {
    %c0_i32 = arith.constant 0 : i32
    %c0_i32_0 = arith.constant 0 : i32
    %c0_i32_1 = arith.constant 0 : i32
    return %c0_i32, %c0_i32_0 : i32, i32
  }
  func.func @transform_4(%arg0: i32) -> (i32, i32) {
    %c0_i32 = arith.constant 0 : i32
    %c0_i32_0 = arith.constant 0 : i32
    %c0_i32_1 = arith.constant 0 : i32
    return %c0_i32, %c0_i32_0 : i32, i32
  }
  func.func @transform_5(%arg0: i32) -> (i32, i32) {
    %c0_i32 = arith.constant 0 : i32
    %c0_i32_0 = arith.constant 0 : i32
    %c0_i32_1 = arith.constant 0 : i32
    return %c0_i32, %c0_i32_0 : i32, i32
  }
  func.func @transform_6(%arg0: i32) -> (i32, i32) {
    %c0_i32 = arith.constant 0 : i32
    %c0_i32_0 = arith.constant 0 : i32
    %c0_i32_1 = arith.constant 0 : i32
    return %c0_i32, %c0_i32_0 : i32, i32
  }
  func.func @transform_7(%arg0: i32) -> (i32, i32) {
    %c0_i32 = arith.constant 0 : i32
    %c0_i32_0 = arith.constant 0 : i32
    %c0_i32_1 = arith.constant 0 : i32
    return %c0_i32, %c0_i32_0 : i32, i32
  }
  func.func @transform_8(%arg0: i32) -> (i32, i32) {
    %c0_i32 = arith.constant 0 : i32
    %c0_i32_0 = arith.constant 0 : i32
    %c0_i32_1 = arith.constant 0 : i32
    return %c0_i32, %c0_i32_0 : i32, i32
  }
  func.func @transform_9(%arg0: i32) -> (i32, i32) {
    %c0_i32 = arith.constant 0 : i32
    %c0_i32_0 = arith.constant 0 : i32
    %c0_i32_1 = arith.constant 0 : i32
    return %c0_i32, %c0_i32_0 : i32, i32
  }
  func.func @transform_10(%arg0: i32) -> (i32, i32) {
    %c0_i32 = arith.constant 0 : i32
    %c0_i32_0 = arith.constant 0 : i32
    return %arg0, %c0_i32 : i32, i32
  }
}

</mosaic_0001>

<llo_original>
// kernel: invertible_nn_forward.1
$region0: #{invertible_nn_forward.1}
  #allocation0 [shape = 'u32[]', space=smem, size = 0x4, offset = 0x4, fixed_abs, tag = 'smem constant byte address 0x4 - core index']
  #allocation1 [shape = 'u32[144,128]{1,0:T(1,128)}', space=vmem, size = 0x12000, scoped, tag = 'internal scratch']
  #allocation2 [shape = 'f32[8,128]{1,0:T(8,128)}', space=vmem, size = 0x1000, scoped, tag = 'scratch operand']
  %s0 = inlined_call_operand.vmem [shape: f32[8,8], index: 0, kind: input, shape index: {}]
  %s1 = inlined_call_operand.hbm [shape: bf16[128,128], index: 1, kind: input, shape index: {}]
  %s2 = inlined_call_operand.hbm [shape: bf16[128,128], index: 2, kind: input, shape index: {}]
  %s3 = inlined_call_operand.hbm [shape: bf16[128,128], index: 3, kind: input, shape index: {}]
  %s4 = inlined_call_operand.hbm [shape: bf16[128,128], index: 4, kind: input, shape index: {}]
  %s5 = inlined_call_operand.hbm [shape: bf16[128,128], index: 5, kind: input, shape index: {}]
  %s6 = inlined_call_operand.hbm [shape: bf16[128,512], index: 6, kind: input, shape index: {}]
  %s7 = inlined_call_operand.hbm [shape: bf16[256,256], index: 7, kind: input, shape index: {}]
  %s8 = inlined_call_operand.hbm [shape: bf16[256,256], index: 8, kind: input, shape index: {}]
  %s9 = inlined_call_operand.hbm [shape: f32[8,512], index: 9, kind: input, shape index: {}]
  %s10 = inlined_call_operand.vmem [shape: f32[8,8], index: 10, kind: output, shape index: {}]
  %s11 = sld [smem:[#allocation0]]
  $region90: #{invertible_nn_forward.1} parent=0
    _
  %s13 = ssub.s32 1, %s11
  %s14 = scalar_select 0, %s13, %s11
  $region1: #{invertible_nn_forward.1} parent=0
    #allocation3 [shape = 'u8[32768]{0}', space=vmem, size = 0x8000, scoped, tag = 'input window, operand 1, single buffered']
    #allocation4 [shape = 's32[1]{0}', space=sflag, size = 0x4, scoped, tag = 'scoped memory for invertible_nn_forward.1']
    #allocation5 [shape = 'u8[32768]{0}', space=vmem, size = 0x8000, scoped, tag = 'input window, operand 2, single buffered']
    #allocation6 [shape = 's32[1]{0}', space=sflag, size = 0x4, scoped, tag = 'scoped memory for invertible_nn_forward.1']
    #allocation7 [shape = 'u8[32768]{0}', space=vmem, size = 0x8000, scoped, tag = 'input window, operand 3, single buffered']
    #allocation8 [shape = 'u8[32768]{0}', space=vmem, size = 0x8000, scoped, tag = 'input window, operand 4, single buffered']
    #allocation9 [shape = 's32[1]{0}', space=sflag, size = 0x4, scoped, tag = 'scoped memory for invertible_nn_forward.1']
    #allocation10 [shape = 'u8[32768]{0}', space=vmem, size = 0x8000, scoped, tag = 'input window, operand 5, single buffered']
    #allocation11 [shape = 'u8[131072]{0}', space=vmem, size = 0x20000, scoped, tag = 'input window, operand 6, single buffered']
    #allocation12 [shape = 's32[1]{0}', space=sflag, size = 0x4, scoped, tag = 'scoped memory for invertible_nn_forward.1']
    #allocation13 [shape = 'u8[131072]{0}', space=vmem, size = 0x20000, scoped, tag = 'input window, operand 7, single buffered']
    #allocation14 [shape = 'u8[131072]{0}', space=vmem, size = 0x20000, scoped, tag = 'input window, operand 8, single buffered']
    #allocation15 [shape = 's32[1]{0}', space=sflag, size = 0x4, scoped, tag = 'scoped memory for invertible_nn_forward.1']
    #allocation16 [shape = 'u8[16384]{0}', space=vmem, size = 0x4000, scoped, tag = 'input window, operand 9, single buffered']
    %15 = vsyncpa [#allocation4], 0
    %16 = vsyncpa [#allocation6], 0
    %17 = vsyncpa [#allocation9], 0
    %18 = vsyncpa [#allocation12], 0
    %19 = vsyncpa [#allocation15], 0
    // Predicated region
    $region2: #{invertible_nn_forward.1} parent=1 // pred_check
      _
    $region3: #{invertible_nn_forward.1} parent=1 // pred_check_branch
      %21 = sbr.rel (0) target = $region5
    $region4: #{invertible_nn_forward.1} parent=1 // pred_region
      _
    $region5: #{invertible_nn_forward.1} parent=1 // pred_fallthru
      _
    // Predicated region
    $region6: #{invertible_nn_forward.1} parent=1 // pred_check
      _
    $region7: #{invertible_nn_forward.1} parent=1 // pred_check_branch
      %23 = sbr.rel (0) target = $region9
    $region8: #{invertible_nn_forward.1} parent=1 // pred_region
      %s25 = ssub.s32 1024, 1024
      %26 = vsyncadd [#allocation4], %s25
      %s27 = sshll.u32 [#allocation3], 4
      %s28 = int_to_ptr.vmem [resolvable:$true] %s27
      %33 = dma.hbm_to_vmem [thread:$0]  %s1, 1024, %s28, [#allocation4], 64, 64, 4
    $region9: #{invertible_nn_forward.1} parent=1 // pred_fallthru
      _
    // Predicated region
    $region10: #{invertible_nn_forward.1} parent=1 // pred_check
      _
    $region11: #{invertible_nn_forward.1} parent=1 // pred_check_branch
      %35 = sbr.rel (0) target = $region13
    $region12: #{invertible_nn_forward.1} parent=1 // pred_region
      %s37 = ssub.s32 1024, 1024
      %38 = vsyncadd [#allocation6], %s37
      %s39 = sshll.u32 [#allocation5], 4
      %s40 = int_to_ptr.vmem [resolvable:$true] %s39
      %45 = dma.hbm_to_vmem [thread:$0]  %s2, 1024, %s40, [#allocation6], 64, 64, 4
    $region13: #{invertible_nn_forward.1} parent=1 // pred_fallthru
      _
    // Predicated region
    $region14: #{invertible_nn_forward.1} parent=1 // pred_check
      _
    $region15: #{invertible_nn_forward.1} parent=1 // pred_check_branch
      %47 = sbr.rel (0) target = $region17
    $region16: #{invertible_nn_forward.1} parent=1 // pred_region
      %s49 = ssub.s32 1024, 1024
      %50 = vsyncadd [#allocation6], %s49
      %s51 = sshll.u32 [#allocation7], 4
      %s52 = int_to_ptr.vmem [resolvable:$true] %s51
      %57 = dma.hbm_to_vmem [thread:$0]  %s3, 1024, %s52, [#allocation6], 64, 64, 4
    $region17: #{invertible_nn_forward.1} parent=1 // pred_fallthru
      _
    // Predicated region
    $region18: #{invertible_nn_forward.1} parent=1 // pred_check
      _
    $region19: #{invertible_nn_forward.1} parent=1 // pred_check_branch
      %59 = sbr.rel (0) target = $region21
    $region20: #{invertible_nn_forward.1} parent=1 // pred_region
      %s61 = ssub.s32 1024, 1024
      %62 = vsyncadd [#allocation9], %s61
      %s63 = sshll.u32 [#allocation8], 4
      %s64 = int_to_ptr.vmem [resolvable:$true] %s63
      %69 = dma.hbm_to_vmem [thread:$0]  %s4, 1024, %s64, [#allocation9], 64, 64, 4
    $region21: #{invertible_nn_forward.1} parent=1 // pred_fallthru
      _
    // Predicated region
    $region22: #{invertible_nn_forward.1} parent=1 // pred_check
      _
    $region23: #{invertible_nn_forward.1} parent=1 // pred_check_branch
      %71 = sbr.rel (0) target = $region25
    $region24: #{invertible_nn_forward.1} parent=1 // pred_region
      %s73 = ssub.s32 1024, 1024
      %74 = vsyncadd [#allocation9], %s73
      %s75 = sshll.u32 [#allocation10], 4
      %s76 = int_to_ptr.vmem [resolvable:$true] %s75
      %81 = dma.hbm_to_vmem [thread:$0]  %s5, 1024, %s76, [#allocation9], 64, 64, 4
    $region25: #{invertible_nn_forward.1} parent=1 // pred_fallthru
      _
    // Predicated region
    $region26: #{invertible_nn_forward.1} parent=1 // pred_check
      _
    $region27: #{invertible_nn_forward.1} parent=1 // pred_check_branch
      %83 = sbr.rel (0) target = $region29
    $region28: #{invertible_nn_forward.1} parent=1 // pred_region
      %s85 = ssub.s32 4096, 4096
      %86 = vsyncadd [#allocation12], %s85
      %s87 = sshll.u32 [#allocation11], 4
      %s88 = int_to_ptr.vmem [resolvable:$true] %s87
      %93 = dma.hbm_to_vmem [thread:$0]  %s6, 4096, %s88, [#allocation12], 256, 256, 16
    $region29: #{invertible_nn_forward.1} parent=1 // pred_fallthru
      _
    // Predicated region
    $region30: #{invertible_nn_forward.1} parent=1 // pred_check
      _
    $region31: #{invertible_nn_forward.1} parent=1 // pred_check_branch
      %95 = sbr.rel (0) target = $region33
    $region32: #{invertible_nn_forward.1} parent=1 // pred_region
      %s97 = ssub.s32 4096, 4096
      %98 = vsyncadd [#allocation12], %s97
      %s99 = sshll.u32 [#allocation13], 4
      %s100 = int_to_ptr.vmem [resolvable:$true] %s99
      %105 = dma.hbm_to_vmem [thread:$0]  %s7, 4096, %s100, [#allocation12], 128, 128, 8
    $region33: #{invertible_nn_forward.1} parent=1 // pred_fallthru
      _
    // Predicated region
    $region34: #{invertible_nn_forward.1} parent=1 // pred_check
      _
    $region35: #{invertible_nn_forward.1} parent=1 // pred_check_branch
      %107 = sbr.rel (0) target = $region37
    $region36: #{invertible_nn_forward.1} parent=1 // pred_region
      %s109 = ssub.s32 4096, 4096
      %110 = vsyncadd [#allocation15], %s109
      %s111 = sshll.u32 [#allocation14], 4
      %s112 = int_to_ptr.vmem [resolvable:$true] %s111
      %117 = dma.hbm_to_vmem [thread:$0]  %s8, 4096, %s112, [#allocation15], 128, 128, 8
    $region37: #{invertible_nn_forward.1} parent=1 // pred_fallthru
      _
    // Predicated region
    $region38: #{invertible_nn_forward.1} parent=1 // pred_check
      _
    $region39: #{invertible_nn_forward.1} parent=1 // pred_check_branch
      %119 = sbr.rel (0) target = $region41
    $region40: #{invertible_nn_forward.1} parent=1 // pred_region
      %s121 = ssub.s32 512, 512
      %122 = vsyncadd [#allocation15], %s121
      %s124 = sshll.u32 [#allocation16], 4
      %s125 = int_to_ptr.vmem [resolvable:$true] %s124
      %127 = dma.hbm_to_vmem [thread:$0]  %s9, 512, %s125, [#allocation15]
    $region41: #{invertible_nn_forward.1} parent=1 // pred_fallthru
      _
    // Predicated region
    $region42: #{invertible_nn_forward.1} parent=1 // pred_check
      _
    $region43: #{invertible_nn_forward.1} parent=1 // pred_check_branch
      %129 = sbr.rel (0) target = $region45
    $region44: #{invertible_nn_forward.1} parent=1 // pred_region
      %130 = dma.done [#allocation4], 1024
    $region45: #{invertible_nn_forward.1} parent=1 // pred_fallthru
      _
    // Predicated region
    $region46: #{invertible_nn_forward.1} parent=1 // pred_check
      _
    $region47: #{invertible_nn_forward.1} parent=1 // pred_check_branch
      %132 = sbr.rel (0) target = $region49
    $region48: #{invertible_nn_forward.1} parent=1 // pred_region
      %133 = dma.done [#allocation6], 1024
    $region49: #{invertible_nn_forward.1} parent=1 // pred_fallthru
      _
    // Predicated region
    $region50: #{invertible_nn_forward.1} parent=1 // pred_check
      _
    $region51: #{invertible_nn_forward.1} parent=1 // pred_check_branch
      %135 = sbr.rel (0) target = $region53
    $region52: #{invertible_nn_forward.1} parent=1 // pred_region
      %136 = dma.done [#allocation6], 1024
    $region53: #{invertible_nn_forward.1} parent=1 // pred_fallthru
      _
    // Predicated region
    $region54: #{invertible_nn_forward.1} parent=1 // pred_check
      _
    $region55: #{invertible_nn_forward.1} parent=1 // pred_check_branch
      %138 = sbr.rel (0) target = $region57
    $region56: #{invertible_nn_forward.1} parent=1 // pred_region
      %139 = dma.done [#allocation9], 1024
    $region57: #{invertible_nn_forward.1} parent=1 // pred_fallthru
      _
    // Predicated region
    $region58: #{invertible_nn_forward.1} parent=1 // pred_check
      _
    $region59: #{invertible_nn_forward.1} parent=1 // pred_check_branch
      %141 = sbr.rel (0) target = $region61
    $region60: #{invertible_nn_forward.1} parent=1 // pred_region
      %142 = dma.done [#allocation9], 1024
    $region61: #{invertible_nn_forward.1} parent=1 // pred_fallthru
      _
    // Predicated region
    $region62: #{invertible_nn_forward.1} parent=1 // pred_check
      _
    $region63: #{invertible_nn_forward.1} parent=1 // pred_check_branch
      %144 = sbr.rel (0) target = $region65
    $region64: #{invertible_nn_forward.1} parent=1 // pred_region
      %145 = dma.done [#allocation12], 4096
    $region65: #{invertible_nn_forward.1} parent=1 // pred_fallthru
      _
    // Predicated region
    $region66: #{invertible_nn_forward.1} parent=1 // pred_check
      _
    $region67: #{invertible_nn_forward.1} parent=1 // pred_check_branch
      %147 = sbr.rel (0) target = $region69
    $region68: #{invertible_nn_forward.1} parent=1 // pred_region
      %148 = dma.done [#allocation12], 4096
    $region69: #{invertible_nn_forward.1} parent=1 // pred_fallthru
      _
    // Predicated region
    $region70: #{invertible_nn_forward.1} parent=1 // pred_check
      _
    $region71: #{invertible_nn_forward.1} parent=1 // pred_check_branch
      %150 = sbr.rel (0) target = $region73
    $region72: #{invertible_nn_forward.1} parent=1 // pred_region
      %151 = dma.done [#allocation15], 4096
    $region73: #{invertible_nn_forward.1} parent=1 // pred_fallthru
      _
    // Predicated region
    $region74: #{invertible_nn_forward.1} parent=1 // pred_check
      _
    $region75: #{invertible_nn_forward.1} parent=1 // pred_check_branch
      %153 = sbr.rel (0) target = $region77
    $region76: #{invertible_nn_forward.1} parent=1 // pred_region
      %154 = dma.done [#allocation15], 512
    $region77: #{invertible_nn_forward.1} parent=1 // pred_fallthru
      _
    %p156 = scmp.eq.s32.totalorder 0, 0
    // Predicated region
    $region78: #{invertible_nn_forward.1} parent=1 // pred_check
      %p157 = pneg %p156
    $region79: #{invertible_nn_forward.1} parent=1 // pred_check_branch
      %159 = sbr.rel (%p157) target = $region81
    $region80: #{invertible_nn_forward.1} parent=1 // pred_region
      %160 = vst [vmem:[#allocation2] sm:$0xff] 0.0
    $region81: #{invertible_nn_forward.1} parent=1 // pred_fallthru
      _
    %v161 = vld [vmem:[%s0] sm:$0xff]
    %vm162 = vcmask 64512
    %163 = vst.msk [vmem:[#allocation2] sm:$0xff] %vm162, %v161
    %v164 = vld [vmem:[#allocation2] sm:$0xff]
    %v165 = vld [vmem:[#allocation16] ss:$0 sm:$0xff]
    %v166 = vld [vmem:[#allocation16 + $0x1] ss:$0 sm:$0xff]
    %v167 = vld [vmem:[#allocation16 + $0x2] ss:$0 sm:$0xff]
    %v168 = vld [vmem:[#allocation16 + $0x3] ss:$0 sm:$0xff]
    %s169 = scalar_lea.vmem [#allocation16], 4
    %v170 = vld [vmem:[%s169] ss:$8 sm:$0xf]
    %s171 = scalar_lea.vmem [#allocation16], 5
    %v172 = vld [vmem:[%s171] ss:$8 sm:$0x3]
    %s173 = scalar_lea.vmem [#allocation16], 6
    %v174 = vld [vmem:[%s173] ss:$8 sm:$0x3]
    %v175 = vpack.c.bf16 %v164, %v164
    %v176 = vld [vmem:[#allocation3] sm:$0xf]
    %v177 = vld [vmem:[#allocation3 + $0x4] sm:$0xf]
    %v178 = vld [vmem:[#allocation3 + $0x8] sm:$0xf]
    %v179 = vld [vmem:[#allocation3 + $0xc] sm:$0xf]
    %v180 = vld [vmem:[#allocation3 + $0x10] sm:$0xf]
    %v181 = vld [vmem:[#allocation3 + $0x14] sm:$0xf]
    %v182 = vld [vmem:[#allocation3 + $0x18] sm:$0xf]
    %v183 = vld [vmem:[#allocation3 + $0x1c] sm:$0xf]
    %v184 = vld [vmem:[#allocation3 + $0x20] sm:$0xf]
    %v185 = vld [vmem:[#allocation3 + $0x24] sm:$0xf]
    %v186 = vld [vmem:[#allocation3 + $0x28] sm:$0xf]
    %v187 = vld [vmem:[#allocation3 + $0x2c] sm:$0xf]
    %v188 = vld [vmem:[#allocation3 + $0x30] sm:$0xf]
    %v189 = vld [vmem:[#allocation3 + $0x34] sm:$0xf]
    %v190 = vld [vmem:[#allocation3 + $0x38] sm:$0xf]
    %v191 = vld [vmem:[#allocation3 + $0x3c] sm:$0xf]
    %v208 = vunpack.c.l.b16 %v176
    %v209 = vunpack.c.l.b16 %v177
    %v210 = vunpack.c.l.b16 %v178
    %v211 = vunpack.c.l.b16 %v179
    %v212 = vunpack.c.l.b16 %v180
    %v213 = vunpack.c.l.b16 %v181
    %v214 = vunpack.c.l.b16 %v182
    %v215 = vunpack.c.l.b16 %v183
    %v216 = vunpack.c.l.b16 %v184
    %v217 = vunpack.c.l.b16 %v185
    %v218 = vunpack.c.l.b16 %v186
    %v219 = vunpack.c.l.b16 %v187
    %v220 = vunpack.c.l.b16 %v188
    %v221 = vunpack.c.l.b16 %v189
    %v222 = vunpack.c.l.b16 %v190
    %v223 = vunpack.c.l.b16 %v191
    %v224 = vpack.c.b16 %v209, %v208
    %v225 = vpack.c.b16 %v211, %v210
    %v226 = vpack.c.b16 %v213, %v212
    %v227 = vpack.c.b16 %v215, %v214
    %v228 = vpack.c.b16 %v217, %v216
    %v229 = vpack.c.b16 %v219, %v218
    %v230 = vpack.c.b16 %v221, %v220
    %v231 = vpack.c.b16 %v223, %v222
    %240 = vmatprep.subr.bf16.mxu0 0
    %241 = vmatpush1.bf16.msra.mxu0 %v224
    %242 = vmatprep.subr.bf16.mxu0 0
    %243 = vmatpush1.bf16.msra.mxu0 %v225
    %244 = vmatprep.subr.bf16.mxu0 0
    %245 = vmatpush1.bf16.msra.mxu0 %v226
    %246 = vmatprep.subr.bf16.mxu0 0
    %247 = vmatpush1.bf16.msra.mxu0 %v227
    %248 = vmatprep.subr.bf16.mxu0 0
    %249 = vmatpush1.bf16.msra.mxu0 %v228
    %250 = vmatprep.subr.bf16.mxu0 0
    %251 = vmatpush1.bf16.msra.mxu0 %v229
    %252 = vmatprep.subr.bf16.mxu0 0
    %253 = vmatpush1.bf16.msra.mxu0 %v230
    %254 = vmatprep.subr.bf16.mxu0 0
    %255 = vmatpush1.bf16.msra.mxu0 %v231
    %256 = vmatprep.subr.bf16.mxu0 0
    %257 = vmatpush1.bf16.msra.mxu0 0
    %258 = vmatprep.subr.bf16.mxu0 0
    %259 = vmatpush1.bf16.msra.mxu0 0
    %260 = vmatprep.subr.bf16.mxu0 0
    %261 = vmatpush1.bf16.msra.mxu0 0
    %262 = vmatprep.subr.bf16.mxu0 0
    %263 = vmatpush1.bf16.msra.mxu0 0
    %264 = vmatprep.subr.bf16.mxu0 0
    %265 = vmatpush1.bf16.msra.mxu0 0
    %266 = vmatprep.subr.bf16.mxu0 0
    %267 = vmatpush1.bf16.msra.mxu0 0
    %268 = vmatprep.subr.bf16.mxu0 0
    %269 = vmatpush1.bf16.msra.mxu0 0
    %270 = vmatprep.subr.bf16.mxu0 0
    %271 = vmatpush1.bf16.msra.mxu0 0
    %272 = vmatprep.mubr.bf16.mxu0 0
    %273 = vmatmul.mubr.bf16.gmra.mrb[0].mxu0 %v175
    %v274 = vpop.f32.mrb[0].mxu0
    %v275 = vadd.f32 %v165, %v274
    %v276 = vpop.f32.mrb[0].mxu0
    %v277 = vpop.f32.mrb[0].mxu0
    %v278 = vpop.f32.mrb[0].mxu0
    %279 = vdwg.mxu0
    %v280 = vmax.f32 %v275, 0.0
    %v281 = vpack.c.bf16 %v280, %v280
    %v282 = vld [vmem:[#allocation5] sm:$0xf]
    %v283 = vld [vmem:[#allocation5 + $0x4] sm:$0xf]
    %v284 = vld [vmem:[#allocation5 + $0x8] sm:$0xf]
    %v285 = vld [vmem:[#allocation5 + $0xc] sm:$0xf]
    %v286 = vld [vmem:[#allocation5 + $0x10] sm:$0xf]
    %v287 = vld [vmem:[#allocation5 + $0x14] sm:$0xf]
    %v288 = vld [vmem:[#allocation5 + $0x18] sm:$0xf]
    %v289 = vld [vmem:[#allocation5 + $0x1c] sm:$0xf]
    %v290 = vld [vmem:[#allocation5 + $0x20] sm:$0xf]
    %v291 = vld [vmem:[#allocation5 + $0x24] sm:$0xf]
    %v292 = vld [vmem:[#allocation5 + $0x28] sm:$0xf]
    %v293 = vld [vmem:[#allocation5 + $0x2c] sm:$0xf]
    %v294 = vld [vmem:[#allocation5 + $0x30] sm:$0xf]
    %v295 = vld [vmem:[#allocation5 + $0x34] sm:$0xf]
    %v296 = vld [vmem:[#allocation5 + $0x38] sm:$0xf]
    %v297 = vld [vmem:[#allocation5 + $0x3c] sm:$0xf]
    %v314 = vunpack.c.l.b16 %v282
    %v315 = vunpack.c.l.b16 %v283
    %v316 = vunpack.c.l.b16 %v284
    %v317 = vunpack.c.l.b16 %v285
    %v318 = vunpack.c.l.b16 %v286
    %v319 = vunpack.c.l.b16 %v287
    %v320 = vunpack.c.l.b16 %v288
    %v321 = vunpack.c.l.b16 %v289
    %v322 = vunpack.c.l.b16 %v290
    %v323 = vunpack.c.l.b16 %v291
    %v324 = vunpack.c.l.b16 %v292
    %v325 = vunpack.c.l.b16 %v293
    %v326 = vunpack.c.l.b16 %v294
    %v327 = vunpack.c.l.b16 %v295
    %v328 = vunpack.c.l.b16 %v296
    %v329 = vunpack.c.l.b16 %v297
    %v330 = vpack.c.b16 %v315, %v314
    %v331 = vpack.c.b16 %v317, %v316
    %v332 = vpack.c.b16 %v319, %v318
    %v333 = vpack.c.b16 %v321, %v320
    %v334 = vpack.c.b16 %v323, %v322
    %v335 = vpack.c.b16 %v325, %v324
    %v336 = vpack.c.b16 %v327, %v326
    %v337 = vpack.c.b16 %v329, %v328
    %346 = vmatprep.subr.bf16.mxu0 0
    %347 = vmatpush1.bf16.msra.mxu0 %v330
    %348 = vmatprep.subr.bf16.mxu0 0
    %349 = vmatpush1.bf16.msra.mxu0 %v331
    %350 = vmatprep.subr.bf16.mxu0 0
    %351 = vmatpush1.bf16.msra.mxu0 %v332
    %352 = vmatprep.subr.bf16.mxu0 0
    %353 = vmatpush1.bf16.msra.mxu0 %v333
    %354 = vmatprep.subr.bf16.mxu0 0
    %355 = vmatpush1.bf16.msra.mxu0 %v334
    %356 = vmatprep.subr.bf16.mxu0 0
    %357 = vmatpush1.bf16.msra.mxu0 %v335
    %358 = vmatprep.subr.bf16.mxu0 0
    %359 = vmatpush1.bf16.msra.mxu0 %v336
    %360 = vmatprep.subr.bf16.mxu0 0
    %361 = vmatpush1.bf16.msra.mxu0 %v337
    %362 = vmatprep.subr.bf16.mxu0 0
    %363 = vmatpush1.bf16.msra.mxu0 0
    %364 = vmatprep.subr.bf16.mxu0 0
    %365 = vmatpush1.bf16.msra.mxu0 0
    %366 = vmatprep.subr.bf16.mxu0 0
    %367 = vmatpush1.bf16.msra.mxu0 0
    %368 = vmatprep.subr.bf16.mxu0 0
    %369 = vmatpush1.bf16.msra.mxu0 0
    %370 = vmatprep.subr.bf16.mxu0 0
    %371 = vmatpush1.bf16.msra.mxu0 0
    %372 = vmatprep.subr.bf16.mxu0 0
    %373 = vmatpush1.bf16.msra.mxu0 0
    %374 = vmatprep.subr.bf16.mxu0 0
    %375 = vmatpush1.bf16.msra.mxu0 0
    %376 = vmatprep.subr.bf16.mxu0 0
    %377 = vmatpush1.bf16.msra.mxu0 0
    %378 = vmatprep.mubr.bf16.mxu0 0
    %379 = vmatmul.mubr.bf16.gmra.mrb[0].mxu0 %v281
    %v380 = vpop.f32.mrb[0].mxu0
    %v381 = vadd.f32 %v166, %v380
    %v382 = vpop.f32.mrb[0].mxu0
    %v383 = vpop.f32.mrb[0].mxu0
    %v384 = vpop.f32.mrb[0].mxu0
    %385 = vdwg.mxu0
    %v386 = vld [vmem:[#allocation7] sm:$0xf]
    %v387 = vld [vmem:[#allocation7 + $0x4] sm:$0xf]
    %v388 = vld [vmem:[#allocation7 + $0x8] sm:$0xf]
    %v389 = vld [vmem:[#allocation7 + $0xc] sm:$0xf]
    %v390 = vld [vmem:[#allocation7 + $0x10] sm:$0xf]
    %v391 = vld [vmem:[#allocation7 + $0x14] sm:$0xf]
    %v392 = vld [vmem:[#allocation7 + $0x18] sm:$0xf]
    %v393 = vld [vmem:[#allocation7 + $0x1c] sm:$0xf]
    %v394 = vld [vmem:[#allocation7 + $0x20] sm:$0xf]
    %v395 = vld [vmem:[#allocation7 + $0x24] sm:$0xf]
    %v396 = vld [vmem:[#allocation7 + $0x28] sm:$0xf]
    %v397 = vld [vmem:[#allocation7 + $0x2c] sm:$0xf]
    %v398 = vld [vmem:[#allocation7 + $0x30] sm:$0xf]
    %v399 = vld [vmem:[#allocation7 + $0x34] sm:$0xf]
    %v400 = vld [vmem:[#allocation7 + $0x38] sm:$0xf]
    %v401 = vld [vmem:[#allocation7 + $0x3c] sm:$0xf]
    %v402 = vpack.c.bf16 %v381, %v381
    %v403 = vld [vmem:[#allocation8] sm:$0xf]
    %v404 = vld [vmem:[#allocation8 + $0x4] sm:$0xf]
    %v405 = vld [vmem:[#allocation8 + $0x8] sm:$0xf]
    %v406 = vld [vmem:[#allocation8 + $0xc] sm:$0xf]
    %v407 = vld [vmem:[#allocation8 + $0x10] sm:$0xf]
    %v408 = vld [vmem:[#allocation8 + $0x14] sm:$0xf]
    %v409 = vld [vmem:[#allocation8 + $0x18] sm:$0xf]
    %v410 = vld [vmem:[#allocation8 + $0x1c] sm:$0xf]
    %v411 = vld [vmem:[#allocation8 + $0x20] sm:$0xf]
    %v412 = vld [vmem:[#allocation8 + $0x24] sm:$0xf]
    %v413 = vld [vmem:[#allocation8 + $0x28] sm:$0xf]
    %v414 = vld [vmem:[#allocation8 + $0x2c] sm:$0xf]
    %v415 = vld [vmem:[#allocation8 + $0x30] sm:$0xf]
    %v416 = vld [vmem:[#allocation8 + $0x34] sm:$0xf]
    %v417 = vld [vmem:[#allocation8 + $0x38] sm:$0xf]
    %v418 = vld [vmem:[#allocation8 + $0x3c] sm:$0xf]
    %v435 = vunpack.c.l.b16 %v403
    %v436 = vunpack.c.l.b16 %v404
    %v437 = vunpack.c.l.b16 %v405
    %v438 = vunpack.c.l.b16 %v406
    %v439 = vunpack.c.l.b16 %v407
    %v440 = vunpack.c.l.b16 %v408
    %v441 = vunpack.c.l.b16 %v409
    %v442 = vunpack.c.l.b16 %v410
    %v443 = vunpack.c.l.b16 %v411
    %v444 = vunpack.c.l.b16 %v412
    %v445 = vunpack.c.l.b16 %v413
    %v446 = vunpack.c.l.b16 %v414
    %v447 = vunpack.c.l.b16 %v415
    %v448 = vunpack.c.l.b16 %v416
    %v449 = vunpack.c.l.b16 %v417
    %v450 = vunpack.c.l.b16 %v418
    %v451 = vpack.c.b16 %v436, %v435
    %v452 = vpack.c.b16 %v438, %v437
    %v453 = vpack.c.b16 %v440, %v439
    %v454 = vpack.c.b16 %v442, %v441
    %v455 = vpack.c.b16 %v444, %v443
    %v456 = vpack.c.b16 %v446, %v445
    %v457 = vpack.c.b16 %v448, %v447
    %v458 = vpack.c.b16 %v450, %v449
    %467 = vmatprep.subr.bf16.mxu0 0
    %468 = vmatpush1.bf16.msra.mxu0 %v451
    %469 = vmatprep.subr.bf16.mxu0 0
    %470 = vmatpush1.bf16.msra.mxu0 %v452
    %471 = vmatprep.subr.bf16.mxu0 0
    %472 = vmatpush1.bf16.msra.mxu0 %v453
    %473 = vmatprep.subr.bf16.mxu0 0
    %474 = vmatpush1.bf16.msra.mxu0 %v454
    %475 = vmatprep.subr.bf16.mxu0 0
    %476 = vmatpush1.bf16.msra.mxu0 %v455
    %477 = vmatprep.subr.bf16.mxu0 0
    %478 = vmatpush1.bf16.msra.mxu0 %v456
    %479 = vmatprep.subr.bf16.mxu0 0
    %480 = vmatpush1.bf16.msra.mxu0 %v457
    %481 = vmatprep.subr.bf16.mxu0 0
    %482 = vmatpush1.bf16.msra.mxu0 %v458
    %483 = vmatprep.subr.bf16.mxu0 0
    %484 = vmatpush1.bf16.msra.mxu0 0
    %485 = vmatprep.subr.bf16.mxu0 0
    %486 = vmatpush1.bf16.msra.mxu0 0
    %487 = vmatprep.subr.bf16.mxu0 0
    %488 = vmatpush1.bf16.msra.mxu0 0
    %489 = vmatprep.subr.bf16.mxu0 0
    %490 = vmatpush1.bf16.msra.mxu0 0
    %491 = vmatprep.subr.bf16.mxu0 0
    %492 = vmatpush1.bf16.msra.mxu0 0
    %493 = vmatprep.subr.bf16.mxu0 0
    %494 = vmatpush1.bf16.msra.mxu0 0
    %495 = vmatprep.subr.bf16.mxu0 0
    %496 = vmatpush1.bf16.msra.mxu0 0
    %497 = vmatprep.subr.bf16.mxu0 0
    %498 = vmatpush1.bf16.msra.mxu0 0
    %499 = vmatprep.mubr.bf16.mxu0 0
    %500 = vmatmul.mubr.bf16.gmra.mrb[0].mxu0 %v402
    %v501 = vpop.f32.mrb[0].mxu0
    %v502 = vadd.f32 0.0, %v501
    %v503 = vpop.f32.mrb[0].mxu0
    %v504 = vpop.f32.mrb[0].mxu0
    %v505 = vpop.f32.mrb[0].mxu0
    %506 = vdwg.mxu0
    %v523 = vunpack.c.l.b16 %v386
    %v524 = vunpack.c.l.b16 %v387
    %v525 = vunpack.c.l.b16 %v388
    %v526 = vunpack.c.l.b16 %v389
    %v527 = vunpack.c.l.b16 %v390
    %v528 = vunpack.c.l.b16 %v391
    %v529 = vunpack.c.l.b16 %v392
    %v530 = vunpack.c.l.b16 %v393
    %v531 = vunpack.c.l.b16 %v394
    %v532 = vunpack.c.l.b16 %v395
    %v533 = vunpack.c.l.b16 %v396
    %v534 = vunpack.c.l.b16 %v397
    %v535 = vunpack.c.l.b16 %v398
    %v536 = vunpack.c.l.b16 %v399
    %v537 = vunpack.c.l.b16 %v400
    %v538 = vunpack.c.l.b16 %v401
    %v539 = vpack.c.b16 %v524, %v523
    %v540 = vpack.c.b16 %v526, %v525
    %v541 = vpack.c.b16 %v528, %v527
    %v542 = vpack.c.b16 %v530, %v529
    %v543 = vpack.c.b16 %v532, %v531
    %v544 = vpack.c.b16 %v534, %v533
    %v545 = vpack.c.b16 %v536, %v535
    %v546 = vpack.c.b16 %v538, %v537
    %555 = vmatprep.subr.bf16.mxu0 0
    %556 = vmatpush1.bf16.msra.mxu0 %v539
    %557 = vmatprep.subr.bf16.mxu0 0
    %558 = vmatpush1.bf16.msra.mxu0 %v540
    %559 = vmatprep.subr.bf16.mxu0 0
    %560 = vmatpush1.bf16.msra.mxu0 %v541
    %561 = vmatprep.subr.bf16.mxu0 0
    %562 = vmatpush1.bf16.msra.mxu0 %v542
    %563 = vmatprep.subr.bf16.mxu0 0
    %564 = vmatpush1.bf16.msra.mxu0 %v543
    %565 = vmatprep.subr.bf16.mxu0 0
    %566 = vmatpush1.bf16.msra.mxu0 %v544
    %567 = vmatprep.subr.bf16.mxu0 0
    %568 = vmatpush1.bf16.msra.mxu0 %v545
    %569 = vmatprep.subr.bf16.mxu0 0
    %570 = vmatpush1.bf16.msra.mxu0 %v546
    %571 = vmatprep.subr.bf16.mxu0 0
    %572 = vmatpush1.bf16.msra.mxu0 0
    %573 = vmatprep.subr.bf16.mxu0 0
    %574 = vmatpush1.bf16.msra.mxu0 0
    %575 = vmatprep.subr.bf16.mxu0 0
    %576 = vmatpush1.bf16.msra.mxu0 0
    %577 = vmatprep.subr.bf16.mxu0 0
    %578 = vmatpush1.bf16.msra.mxu0 0
    %579 = vmatprep.subr.bf16.mxu0 0
    %580 = vmatpush1.bf16.msra.mxu0 0
    %581 = vmatprep.subr.bf16.mxu0 0
    %582 = vmatpush1.bf16.msra.mxu0 0
    %583 = vmatprep.subr.bf16.mxu0 0
    %584 = vmatpush1.bf16.msra.mxu0 0
    %585 = vmatprep.subr.bf16.mxu0 0
    %586 = vmatpush1.bf16.msra.mxu0 0
    %587 = vmatprep.mubr.bf16.mxu0 0
    %588 = vmatmul.mubr.bf16.gmra.mrb[0].mxu0 %v175
    %v589 = vpop.f32.mrb[0].mxu0
    %v590 = vadd.f32 %v502, %v589
    %v591 = vpop.f32.mrb[0].mxu0
    %v592 = vpop.f32.mrb[0].mxu0
    %v593 = vpop.f32.mrb[0].mxu0
    %594 = vdwg.mxu0
    %v595 = vadd.f32 %v590, %v167
    %v596 = vmax.f32 %v595, 0.0
    %v597 = vpack.c.bf16 %v596, %v596
    %v598 = vld [vmem:[#allocation10] sm:$0xf]
    %v599 = vld [vmem:[#allocation10 + $0x4] sm:$0xf]
    %v600 = vld [vmem:[#allocation10 + $0x8] sm:$0xf]
    %v601 = vld [vmem:[#allocation10 + $0xc] sm:$0xf]
    %v602 = vld [vmem:[#allocation10 + $0x10] sm:$0xf]
    %v603 = vld [vmem:[#allocation10 + $0x14] sm:$0xf]
    %v604 = vld [vmem:[#allocation10 + $0x18] sm:$0xf]
    %v605 = vld [vmem:[#allocation10 + $0x1c] sm:$0xf]
    %v606 = vld [vmem:[#allocation10 + $0x20] sm:$0xf]
    %v607 = vld [vmem:[#allocation10 + $0x24] sm:$0xf]
    %v608 = vld [vmem:[#allocation10 + $0x28] sm:$0xf]
    %v609 = vld [vmem:[#allocation10 + $0x2c] sm:$0xf]
    %v610 = vld [vmem:[#allocation10 + $0x30] sm:$0xf]
    %v611 = vld [vmem:[#allocation10 + $0x34] sm:$0xf]
    %v612 = vld [vmem:[#allocation10 + $0x38] sm:$0xf]
    %v613 = vld [vmem:[#allocation10 + $0x3c] sm:$0xf]
    %v630 = vunpack.c.l.b16 %v598
    %v631 = vunpack.c.l.b16 %v599
    %v632 = vunpack.c.l.b16 %v600
    %v633 = vunpack.c.l.b16 %v601
    %v634 = vunpack.c.l.b16 %v602
    %v635 = vunpack.c.l.b16 %v603
    %v636 = vunpack.c.l.b16 %v604
    %v637 = vunpack.c.l.b16 %v605
    %v638 = vunpack.c.l.b16 %v606
    %v639 = vunpack.c.l.b16 %v607
    %v640 = vunpack.c.l.b16 %v608
    %v641 = vunpack.c.l.b16 %v609
    %v642 = vunpack.c.l.b16 %v610
    %v643 = vunpack.c.l.b16 %v611
    %v644 = vunpack.c.l.b16 %v612
    %v645 = vunpack.c.l.b16 %v613
    %v646 = vpack.c.b16 %v631, %v630
    %v647 = vpack.c.b16 %v633, %v632
    %v648 = vpack.c.b16 %v635, %v634
    %v649 = vpack.c.b16 %v637, %v636
    %v650 = vpack.c.b16 %v639, %v638
    %v651 = vpack.c.b16 %v641, %v640
    %v652 = vpack.c.b16 %v643, %v642
    %v653 = vpack.c.b16 %v645, %v644
    %662 = vmatprep.subr.bf16.mxu0 0
    %663 = vmatpush1.bf16.msra.mxu0 %v646
    %664 = vmatprep.subr.bf16.mxu0 0
    %665 = vmatpush1.bf16.msra.mxu0 %v647
    %666 = vmatprep.subr.bf16.mxu0 0
    %667 = vmatpush1.bf16.msra.mxu0 %v648
    %668 = vmatprep.subr.bf16.mxu0 0
    %669 = vmatpush1.bf16.msra.mxu0 %v649
    %670 = vmatprep.subr.bf16.mxu0 0
    %671 = vmatpush1.bf16.msra.mxu0 %v650
    %672 = vmatprep.subr.bf16.mxu0 0
    %673 = vmatpush1.bf16.msra.mxu0 %v651
    %674 = vmatprep.subr.bf16.mxu0 0
    %675 = vmatpush1.bf16.msra.mxu0 %v652
    %676 = vmatprep.subr.bf16.mxu0 0
    %677 = vmatpush1.bf16.msra.mxu0 %v653
    %678 = vmatprep.subr.bf16.mxu0 0
    %679 = vmatpush1.bf16.msra.mxu0 0
    %680 = vmatprep.subr.bf16.mxu0 0
    %681 = vmatpush1.bf16.msra.mxu0 0
    %682 = vmatprep.subr.bf16.mxu0 0
    %683 = vmatpush1.bf16.msra.mxu0 0
    %684 = vmatprep.subr.bf16.mxu0 0
    %685 = vmatpush1.bf16.msra.mxu0 0
    %686 = vmatprep.subr.bf16.mxu0 0
    %687 = vmatpush1.bf16.msra.mxu0 0
    %688 = vmatprep.subr.bf16.mxu0 0
    %689 = vmatpush1.bf16.msra.mxu0 0
    %690 = vmatprep.subr.bf16.mxu0 0
    %691 = vmatpush1.bf16.msra.mxu0 0
    %692 = vmatprep.subr.bf16.mxu0 0
    %693 = vmatpush1.bf16.msra.mxu0 0
    %694 = vmatprep.mubr.bf16.mxu0 0
    %695 = vmatmul.mubr.bf16.gmra.mrb[0].mxu0 %v597
    %v696 = vpop.f32.mrb[0].mxu0
    %v697 = vadd.f32 %v168, %v696
    %v698 = vpop.f32.mrb[0].mxu0
    %v699 = vpop.f32.mrb[0].mxu0
    %v700 = vpop.f32.mrb[0].mxu0
    %701 = vdwg.mxu0
    %v702 = vpack.c.bf16 %v697, %v697
    %v703 = vld [vmem:[#allocation11] sm:$0xff]
    %v704 = vld [vmem:[#allocation11 + $0x8] sm:$0xff]
    %v705 = vld [vmem:[#allocation11 + $0x10] sm:$0xff]
    %v706 = vld [vmem:[#allocation11 + $0x18] sm:$0xff]
    %v707 = vld [vmem:[#allocation11 + $0x20] sm:$0xff]
    %v708 = vld [vmem:[#allocation11 + $0x28] sm:$0xff]
    %v709 = vld [vmem:[#allocation11 + $0x30] sm:$0xff]
    %v710 = vld [vmem:[#allocation11 + $0x38] sm:$0xff]
    %v711 = vld [vmem:[#allocation11 + $0x40] sm:$0xff]
    %v712 = vld [vmem:[#allocation11 + $0x48] sm:$0xff]
    %v713 = vld [vmem:[#allocation11 + $0x50] sm:$0xff]
    %v714 = vld [vmem:[#allocation11 + $0x58] sm:$0xff]
    %v715 = vld [vmem:[#allocation11 + $0x60] sm:$0xff]
    %v716 = vld [vmem:[#allocation11 + $0x68] sm:$0xff]
    %v717 = vld [vmem:[#allocation11 + $0x70] sm:$0xff]
    %v718 = vld [vmem:[#allocation11 + $0x78] sm:$0xff]
    %v719 = vld [vmem:[#allocation11 + $0x80] sm:$0xff]
    %v720 = vld [vmem:[#allocation11 + $0x88] sm:$0xff]
    %v721 = vld [vmem:[#allocation11 + $0x90] sm:$0xff]
    %v722 = vld [vmem:[#allocation11 + $0x98] sm:$0xff]
    %v723 = vld [vmem:[#allocation11 + $0xa0] sm:$0xff]
    %v724 = vld [vmem:[#allocation11 + $0xa8] sm:$0xff]
    %v725 = vld [vmem:[#allocation11 + $0xb0] sm:$0xff]
    %v726 = vld [vmem:[#allocation11 + $0xb8] sm:$0xff]
    %v727 = vld [vmem:[#allocation11 + $0xc0] sm:$0xff]
    %v728 = vld [vmem:[#allocation11 + $0xc8] sm:$0xff]
    %v729 = vld [vmem:[#allocation11 + $0xd0] sm:$0xff]
    %v730 = vld [vmem:[#allocation11 + $0xd8] sm:$0xff]
    %v731 = vld [vmem:[#allocation11 + $0xe0] sm:$0xff]
    %v732 = vld [vmem:[#allocation11 + $0xe8] sm:$0xff]
    %v733 = vld [vmem:[#allocation11 + $0xf0] sm:$0xff]
    %v734 = vld [vmem:[#allocation11 + $0xf8] sm:$0xff]
    %v736 = vlaneseq
    %v737 = vshrl.u32 %v736, 7
    %v738 = vsub.s32 0, %v737
    %v739 = vrot.slane %v170, %v738
    %v740 = vlaneseq
    %v741 = vshrl.u32 %v740, 7
    %v742 = vsub.s32 1, %v741
    %v743 = vrot.slane %v170, %v742
    %v744 = vlaneseq
    %v745 = vshrl.u32 %v744, 7
    %v746 = vsub.s32 2, %v745
    %v747 = vrot.slane %v170, %v746
    %v748 = vlaneseq
    %v749 = vshrl.u32 %v748, 7
    %v750 = vsub.s32 3, %v749
    %v751 = vrot.slane %v170, %v750
    %v788 = vunpack.c.l.b16 %v703
    %v789 = vunpack.c.h.b16 %v703
    %v790 = vunpack.c.l.b16 %v704
    %v791 = vunpack.c.h.b16 %v704
    %v792 = vunpack.c.l.b16 %v705
    %v793 = vunpack.c.h.b16 %v705
    %v794 = vunpack.c.l.b16 %v706
    %v795 = vunpack.c.h.b16 %v706
    %v796 = vunpack.c.l.b16 %v707
    %v797 = vunpack.c.h.b16 %v707
    %v798 = vunpack.c.l.b16 %v708
    %v799 = vunpack.c.h.b16 %v708
    %v800 = vunpack.c.l.b16 %v709
    %v801 = vunpack.c.h.b16 %v709
    %v802 = vunpack.c.l.b16 %v710
    %v803 = vunpack.c.h.b16 %v710
    %v804 = vunpack.c.l.b16 %v711
    %v805 = vunpack.c.h.b16 %v711
    %v806 = vunpack.c.l.b16 %v712
    %v807 = vunpack.c.h.b16 %v712
    %v808 = vunpack.c.l.b16 %v713
    %v809 = vunpack.c.h.b16 %v713
    %v810 = vunpack.c.l.b16 %v714
    %v811 = vunpack.c.h.b16 %v714
    %v812 = vunpack.c.l.b16 %v715
    %v813 = vunpack.c.h.b16 %v715
    %v814 = vunpack.c.l.b16 %v716
    %v815 = vunpack.c.h.b16 %v716
    %v816 = vunpack.c.l.b16 %v717
    %v817 = vunpack.c.h.b16 %v717
    %v818 = vunpack.c.l.b16 %v718
    %v819 = vunpack.c.h.b16 %v718
    %v820 = vunpack.c.l.b16 %v719
    %v821 = vunpack.c.h.b16 %v719
    %v822 = vunpack.c.l.b16 %v720
    %v823 = vunpack.c.h.b16 %v720
    %v824 = vunpack.c.l.b16 %v721
    %v825 = vunpack.c.h.b16 %v721
    %v826 = vunpack.c.l.b16 %v722
    %v827 = vunpack.c.h.b16 %v722
    %v828 = vunpack.c.l.b16 %v723
    %v829 = vunpack.c.h.b16 %v723
    %v830 = vunpack.c.l.b16 %v724
    %v831 = vunpack.c.h.b16 %v724
    %v832 = vunpack.c.l.b16 %v725
    %v833 = vunpack.c.h.b16 %v725
    %v834 = vunpack.c.l.b16 %v726
    %v835 = vunpack.c.h.b16 %v726
    %v836 = vunpack.c.l.b16 %v727
    %v837 = vunpack.c.h.b16 %v727
    %v838 = vunpack.c.l.b16 %v728
    %v839 = vunpack.c.h.b16 %v728
    %v840 = vunpack.c.l.b16 %v729
    %v841 = vunpack.c.h.b16 %v729
    %v842 = vunpack.c.l.b16 %v730
    %v843 = vunpack.c.h.b16 %v730
    %v844 = vunpack.c.l.b16 %v731
    %v845 = vunpack.c.h.b16 %v731
    %v846 = vunpack.c.l.b16 %v732
    %v847 = vunpack.c.h.b16 %v732
    %v848 = vunpack.c.l.b16 %v733
    %v849 = vunpack.c.h.b16 %v733
    %v850 = vunpack.c.l.b16 %v734
    %v851 = vunpack.c.h.b16 %v734
    %v852 = vpack.c.b16 %v792, %v788
    %v853 = vpack.c.b16 %v793, %v789
    %v854 = vpack.c.b16 %v794, %v790
    %v855 = vpack.c.b16 %v795, %v791
    %v856 = vpack.c.b16 %v800, %v796
    %v857 = vpack.c.b16 %v801, %v797
    %v858 = vpack.c.b16 %v802, %v798
    %v859 = vpack.c.b16 %v803, %v799
    %v860 = vpack.c.b16 %v808, %v804
    %v861 = vpack.c.b16 %v809, %v805
    %v862 = vpack.c.b16 %v810, %v806
    %v863 = vpack.c.b16 %v811, %v807
    %v864 = vpack.c.b16 %v816, %v812
    %v865 = vpack.c.b16 %v817, %v813
    %v866 = vpack.c.b16 %v818, %v814
    %v867 = vpack.c.b16 %v819, %v815
    %v868 = vpack.c.b16 %v824, %v820
    %v869 = vpack.c.b16 %v825, %v821
    %v870 = vpack.c.b16 %v826, %v822
    %v871 = vpack.c.b16 %v827, %v823
    %v872 = vpack.c.b16 %v832, %v828
    %v873 = vpack.c.b16 %v833, %v829
    %v874 = vpack.c.b16 %v834, %v830
    %v875 = vpack.c.b16 %v835, %v831
    %v876 = vpack.c.b16 %v840, %v836
    %v877 = vpack.c.b16 %v841, %v837
    %v878 = vpack.c.b16 %v842, %v838
    %v879 = vpack.c.b16 %v843, %v839
    %v880 = vpack.c.b16 %v848, %v844
    %v881 = vpack.c.b16 %v849, %v845
    %v882 = vpack.c.b16 %v850, %v846
    %v883 = vpack.c.b16 %v851, %v847
    %916 = vmatprep.subr.bf16.mxu0 %v853
    %917 = vmatpush1.bf16.msra.mxu0 %v852
    %918 = vmatprep.subr.bf16.mxu0 %v857
    %919 = vmatpush1.bf16.msra.mxu0 %v856
    %920 = vmatprep.subr.bf16.mxu0 %v861
    %921 = vmatpush1.bf16.msra.mxu0 %v860
    %922 = vmatprep.subr.bf16.mxu0 %v865
    %923 = vmatpush1.bf16.msra.mxu0 %v864
    %924 = vmatprep.subr.bf16.mxu0 %v869
    %925 = vmatpush1.bf16.msra.mxu0 %v868
    %926 = vmatprep.subr.bf16.mxu0 %v873
    %927 = vmatpush1.bf16.msra.mxu0 %v872
    %928 = vmatprep.subr.bf16.mxu0 %v877
    %929 = vmatpush1.bf16.msra.mxu0 %v876
    %930 = vmatprep.subr.bf16.mxu0 %v881
    %931 = vmatpush1.bf16.msra.mxu0 %v880
    %932 = vmatprep.subr.bf16.mxu0 0
    %933 = vmatpush1.bf16.msra.mxu0 0
    %934 = vmatprep.subr.bf16.mxu0 0
    %935 = vmatpush1.bf16.msra.mxu0 0
    %936 = vmatprep.subr.bf16.mxu0 0
    %937 = vmatpush1.bf16.msra.mxu0 0
    %938 = vmatprep.subr.bf16.mxu0 0
    %939 = vmatpush1.bf16.msra.mxu0 0
    %940 = vmatprep.subr.bf16.mxu0 0
    %941 = vmatpush1.bf16.msra.mxu0 0
    %942 = vmatprep.subr.bf16.mxu0 0
    %943 = vmatpush1.bf16.msra.mxu0 0
    %944 = vmatprep.subr.bf16.mxu0 0
    %945 = vmatpush1.bf16.msra.mxu0 0
    %946 = vmatprep.subr.bf16.mxu0 0
    %947 = vmatpush1.bf16.msra.mxu0 0
    %948 = vmatprep.mubr.bf16.mxu0 0
    %949 = vmatmul.mubr.bf16.gmra.mrb[0].mxu0 %v702
    %v950 = vpop.f32.mrb[0].mxu0
    %v951 = vadd.f32 %v739, %v950
    %v952 = vpop.f32.mrb[0].mxu0
    %v953 = vadd.f32 %v743, %v952
    %v954 = vpop.f32.mrb[0].mxu0
    %v955 = vpop.f32.mrb[0].mxu0
    %956 = vdwg.mxu0
    %957 = vmatprep.subr.bf16.mxu0 %v855
    %958 = vmatpush1.bf16.msra.mxu0 %v854
    %959 = vmatprep.subr.bf16.mxu0 %v859
    %960 = vmatpush1.bf16.msra.mxu0 %v858
    %961 = vmatprep.subr.bf16.mxu0 %v863
    %962 = vmatpush1.bf16.msra.mxu0 %v862
    %963 = vmatprep.subr.bf16.mxu0 %v867
    %964 = vmatpush1.bf16.msra.mxu0 %v866
    %965 = vmatprep.subr.bf16.mxu0 %v871
    %966 = vmatpush1.bf16.msra.mxu0 %v870
    %967 = vmatprep.subr.bf16.mxu0 %v875
    %968 = vmatpush1.bf16.msra.mxu0 %v874
    %969 = vmatprep.subr.bf16.mxu0 %v879
    %970 = vmatpush1.bf16.msra.mxu0 %v878
    %971 = vmatprep.subr.bf16.mxu0 %v883
    %972 = vmatpush1.bf16.msra.mxu0 %v882
    %973 = vmatprep.subr.bf16.mxu0 0
    %974 = vmatpush1.bf16.msra.mxu0 0
    %975 = vmatprep.subr.bf16.mxu0 0
    %976 = vmatpush1.bf16.msra.mxu0 0
    %977 = vmatprep.subr.bf16.mxu0 0
    %978 = vmatpush1.bf16.msra.mxu0 0
    %979 = vmatprep.subr.bf16.mxu0 0
    %980 = vmatpush1.bf16.msra.mxu0 0
    %981 = vmatprep.subr.bf16.mxu0 0
    %982 = vmatpush1.bf16.msra.mxu0 0
    %983 = vmatprep.subr.bf16.mxu0 0
    %984 = vmatpush1.bf16.msra.mxu0 0
    %985 = vmatprep.subr.bf16.mxu0 0
    %986 = vmatpush1.bf16.msra.mxu0 0
    %987 = vmatprep.subr.bf16.mxu0 0
    %988 = vmatpush1.bf16.msra.mxu0 0
    %989 = vmatprep.mubr.bf16.mxu0 0
    %990 = vmatmul.mubr.bf16.gmra.mrb[0].mxu0 %v702
    %v991 = vpop.f32.mrb[0].mxu0
    %v992 = vadd.f32 %v747, %v991
    %v993 = vpop.f32.mrb[0].mxu0
    %v994 = vadd.f32 %v751, %v993
    %v995 = vpop.f32.mrb[0].mxu0
    %v996 = vpop.f32.mrb[0].mxu0
    %997 = vdwg.mxu0
    %v998 = vmax.f32 %v951, 0.0
    %v999 = vmax.f32 %v953, 0.0
    %v1000 = vmax.f32 %v992, 0.0
    %v1001 = vmax.f32 %v994, 0.0
    %v1002 = vadd.f32 %v998, %v1000
    %v1003 = vadd.f32 %v999, %v1001
    %v1004 = vxor.u32 %v1002, 2147483648
    %v1005 = vxor.u32 %v1003, 2147483648
    %v1006 = vmul.f32 %v1004, 1.442695
    %v1007 = vpow.pop %v1006
    %v1008 = vmul.f32 %v1005, 1.442695
    %v1009 = vpow.pop %v1008
    %v1010 = vadd.f32 %v1007, 1.0
    %v1011 = vadd.f32 %v1009, 1.0
    %v1012 = vrcp.pop %v1010
    %v1013 = vmul.f32 1.0, %v1012
    %v1014 = vrcp.pop %v1011
    %v1015 = vmul.f32 1.0, %v1014
    %v1016 = vmul.f32 %v1013, %v697
    %v1017 = vmul.f32 %v1015, %v697
    %v1018 = vpack.c.bf16 %v1016, %v1016
    %v1019 = vpack.c.bf16 %v1017, %v1017
    %v1020 = vld [vmem:[#allocation13] sm:$0xff]
    %v1021 = vld [vmem:[#allocation13 + $0x8] sm:$0xff]
    %v1022 = vld [vmem:[#allocation13 + $0x10] sm:$0xff]
    %v1023 = vld [vmem:[#allocation13 + $0x18] sm:$0xff]
    %v1024 = vld [vmem:[#allocation13 + $0x20] sm:$0xff]
    %v1025 = vld [vmem:[#allocation13 + $0x28] sm:$0xff]
    %v1026 = vld [vmem:[#allocation13 + $0x30] sm:$0xff]
    %v1027 = vld [vmem:[#allocation13 + $0x38] sm:$0xff]
    %v1028 = vld [vmem:[#allocation13 + $0x40] sm:$0xff]
    %v1029 = vld [vmem:[#allocation13 + $0x48] sm:$0xff]
    %v1030 = vld [vmem:[#allocation13 + $0x50] sm:$0xff]
    %v1031 = vld [vmem:[#allocation13 + $0x58] sm:$0xff]
    %v1032 = vld [vmem:[#allocation13 + $0x60] sm:$0xff]
    %v1033 = vld [vmem:[#allocation13 + $0x68] sm:$0xff]
    %v1034 = vld [vmem:[#allocation13 + $0x70] sm:$0xff]
    %v1035 = vld [vmem:[#allocation13 + $0x78] sm:$0xff]
    %v1036 = vld [vmem:[#allocation13 + $0x80] sm:$0xff]
    %v1037 = vld [vmem:[#allocation13 + $0x88] sm:$0xff]
    %v1038 = vld [vmem:[#allocation13 + $0x90] sm:$0xff]
    %v1039 = vld [vmem:[#allocation13 + $0x98] sm:$0xff]
    %v1040 = vld [vmem:[#allocation13 + $0xa0] sm:$0xff]
    %v1041 = vld [vmem:[#allocation13 + $0xa8] sm:$0xff]
    %v1042 = vld [vmem:[#allocation13 + $0xb0] sm:$0xff]
    %v1043 = vld [vmem:[#allocation13 + $0xb8] sm:$0xff]
    %v1044 = vld [vmem:[#allocation13 + $0xc0] sm:$0xff]
    %v1045 = vld [vmem:[#allocation13 + $0xc8] sm:$0xff]
    %v1046 = vld [vmem:[#allocation13 + $0xd0] sm:$0xff]
    %v1047 = vld [vmem:[#allocation13 + $0xd8] sm:$0xff]
    %v1048 = vld [vmem:[#allocation13 + $0xe0] sm:$0xff]
    %v1049 = vld [vmem:[#allocation13 + $0xe8] sm:$0xff]
    %v1050 = vld [vmem:[#allocation13 + $0xf0] sm:$0xff]
    %v1051 = vld [vmem:[#allocation13 + $0xf8] sm:$0xff]
    %v1053 = vlaneseq
    %v1054 = vshrl.u32 %v1053, 7
    %v1055 = vsub.s32 0, %v1054
    %v1056 = vrot.slane %v172, %v1055
    %v1057 = vlaneseq
    %v1058 = vshrl.u32 %v1057, 7
    %v1059 = vsub.s32 1, %v1058
    %v1060 = vrot.slane %v172, %v1059
    %v1095 = vunpack.c.l.b16 %v1020
    %v1096 = vunpack.c.h.b16 %v1020
    %v1097 = vunpack.c.l.b16 %v1021
    %v1098 = vunpack.c.h.b16 %v1021
    %v1099 = vunpack.c.l.b16 %v1022
    %v1100 = vunpack.c.h.b16 %v1022
    %v1101 = vunpack.c.l.b16 %v1023
    %v1102 = vunpack.c.h.b16 %v1023
    %v1103 = vunpack.c.l.b16 %v1024
    %v1104 = vunpack.c.h.b16 %v1024
    %v1105 = vunpack.c.l.b16 %v1025
    %v1106 = vunpack.c.h.b16 %v1025
    %v1107 = vunpack.c.l.b16 %v1026
    %v1108 = vunpack.c.h.b16 %v1026
    %v1109 = vunpack.c.l.b16 %v1027
    %v1110 = vunpack.c.h.b16 %v1027
    %v1111 = vunpack.c.l.b16 %v1028
    %v1112 = vunpack.c.h.b16 %v1028
    %v1113 = vunpack.c.l.b16 %v1029
    %v1114 = vunpack.c.h.b16 %v1029
    %v1115 = vunpack.c.l.b16 %v1030
    %v1116 = vunpack.c.h.b16 %v1030
    %v1117 = vunpack.c.l.b16 %v1031
    %v1118 = vunpack.c.h.b16 %v1031
    %v1119 = vunpack.c.l.b16 %v1032
    %v1120 = vunpack.c.h.b16 %v1032
    %v1121 = vunpack.c.l.b16 %v1033
    %v1122 = vunpack.c.h.b16 %v1033
    %v1123 = vunpack.c.l.b16 %v1034
    %v1124 = vunpack.c.h.b16 %v1034
    %v1125 = vunpack.c.l.b16 %v1035
    %v1126 = vunpack.c.h.b16 %v1035
    %v1127 = vunpack.c.l.b16 %v1036
    %v1128 = vunpack.c.h.b16 %v1036
    %v1129 = vunpack.c.l.b16 %v1037
    %v1130 = vunpack.c.h.b16 %v1037
    %v1131 = vunpack.c.l.b16 %v1038
    %v1132 = vunpack.c.h.b16 %v1038
    %v1133 = vunpack.c.l.b16 %v1039
    %v1134 = vunpack.c.h.b16 %v1039
    %v1135 = vunpack.c.l.b16 %v1040
    %v1136 = vunpack.c.h.b16 %v1040
    %v1137 = vunpack.c.l.b16 %v1041
    %v1138 = vunpack.c.h.b16 %v1041
    %v1139 = vunpack.c.l.b16 %v1042
    %v1140 = vunpack.c.h.b16 %v1042
    %v1141 = vunpack.c.l.b16 %v1043
    %v1142 = vunpack.c.h.b16 %v1043
    %v1143 = vunpack.c.l.b16 %v1044
    %v1144 = vunpack.c.h.b16 %v1044
    %v1145 = vunpack.c.l.b16 %v1045
    %v1146 = vunpack.c.h.b16 %v1045
    %v1147 = vunpack.c.l.b16 %v1046
    %v1148 = vunpack.c.h.b16 %v1046
    %v1149 = vunpack.c.l.b16 %v1047
    %v1150 = vunpack.c.h.b16 %v1047
    %v1151 = vunpack.c.l.b16 %v1048
    %v1152 = vunpack.c.h.b16 %v1048
    %v1153 = vunpack.c.l.b16 %v1049
    %v1154 = vunpack.c.h.b16 %v1049
    %v1155 = vunpack.c.l.b16 %v1050
    %v1156 = vunpack.c.h.b16 %v1050
    %v1157 = vunpack.c.l.b16 %v1051
    %v1158 = vunpack.c.h.b16 %v1051
    %v1159 = vpack.c.b16 %v1097, %v1095
    %v1160 = vpack.c.b16 %v1098, %v1096
    %v1161 = vpack.c.b16 %v1101, %v1099
    %v1162 = vpack.c.b16 %v1102, %v1100
    %v1163 = vpack.c.b16 %v1105, %v1103
    %v1164 = vpack.c.b16 %v1106, %v1104
    %v1165 = vpack.c.b16 %v1109, %v1107
    %v1166 = vpack.c.b16 %v1110, %v1108
    %v1167 = vpack.c.b16 %v1113, %v1111
    %v1168 = vpack.c.b16 %v1114, %v1112
    %v1169 = vpack.c.b16 %v1117, %v1115
    %v1170 = vpack.c.b16 %v1118, %v1116
    %v1171 = vpack.c.b16 %v1121, %v1119
    %v1172 = vpack.c.b16 %v1122, %v1120
    %v1173 = vpack.c.b16 %v1125, %v1123
    %v1174 = vpack.c.b16 %v1126, %v1124
    %v1175 = vpack.c.b16 %v1129, %v1127
    %v1176 = vpack.c.b16 %v1130, %v1128
    %v1177 = vpack.c.b16 %v1133, %v1131
    %v1178 = vpack.c.b16 %v1134, %v1132
    %v1179 = vpack.c.b16 %v1137, %v1135
    %v1180 = vpack.c.b16 %v1138, %v1136
    %v1181 = vpack.c.b16 %v1141, %v1139
    %v1182 = vpack.c.b16 %v1142, %v1140
    %v1183 = vpack.c.b16 %v1145, %v1143
    %v1184 = vpack.c.b16 %v1146, %v1144
    %v1185 = vpack.c.b16 %v1149, %v1147
    %v1186 = vpack.c.b16 %v1150, %v1148
    %v1187 = vpack.c.b16 %v1153, %v1151
    %v1188 = vpack.c.b16 %v1154, %v1152
    %v1189 = vpack.c.b16 %v1157, %v1155
    %v1190 = vpack.c.b16 %v1158, %v1156
    %1223 = vmatprep.subr.bf16.mxu0 %v1160
    %1224 = vmatpush1.bf16.msra.mxu0 %v1159
    %1225 = vmatprep.subr.bf16.mxu0 %v1162
    %1226 = vmatpush1.bf16.msra.mxu0 %v1161
    %1227 = vmatprep.subr.bf16.mxu0 %v1164
    %1228 = vmatpush1.bf16.msra.mxu0 %v1163
    %1229 = vmatprep.subr.bf16.mxu0 %v1166
    %1230 = vmatpush1.bf16.msra.mxu0 %v1165
    %1231 = vmatprep.subr.bf16.mxu0 %v1168
    %1232 = vmatpush1.bf16.msra.mxu0 %v1167
    %1233 = vmatprep.subr.bf16.mxu0 %v1170
    %1234 = vmatpush1.bf16.msra.mxu0 %v1169
    %1235 = vmatprep.subr.bf16.mxu0 %v1172
    %1236 = vmatpush1.bf16.msra.mxu0 %v1171
    %1237 = vmatprep.subr.bf16.mxu0 %v1174
    %1238 = vmatpush1.bf16.msra.mxu0 %v1173
    %1239 = vmatprep.subr.bf16.mxu0 %v1176
    %1240 = vmatpush1.bf16.msra.mxu0 %v1175
    %1241 = vmatprep.subr.bf16.mxu0 %v1178
    %1242 = vmatpush1.bf16.msra.mxu0 %v1177
    %1243 = vmatprep.subr.bf16.mxu0 %v1180
    %1244 = vmatpush1.bf16.msra.mxu0 %v1179
    %1245 = vmatprep.subr.bf16.mxu0 %v1182
    %1246 = vmatpush1.bf16.msra.mxu0 %v1181
    %1247 = vmatprep.subr.bf16.mxu0 %v1184
    %1248 = vmatpush1.bf16.msra.mxu0 %v1183
    %1249 = vmatprep.subr.bf16.mxu0 %v1186
    %1250 = vmatpush1.bf16.msra.mxu0 %v1185
    %1251 = vmatprep.subr.bf16.mxu0 %v1188
    %1252 = vmatpush1.bf16.msra.mxu0 %v1187
    %1253 = vmatprep.subr.bf16.mxu0 %v1190
    %1254 = vmatpush1.bf16.msra.mxu0 %v1189
    %1255 = vmatprep.mubr.bf16.mxu0 %v1019
    %1256 = vmatmul.mubr.bf16.gmra.mrb[0].mxu0 %v1018
    %v1257 = vpop.f32.mrb[0].mxu0
    %v1258 = vadd.f32 %v1056, %v1257
    %v1259 = vpop.f32.mrb[0].mxu0
    %v1260 = vadd.f32 %v1060, %v1259
    %v1261 = vpop.f32.mrb[0].mxu0
    %v1262 = vpop.f32.mrb[0].mxu0
    %1263 = vdwg.mxu0
    %v1264 = vmax.f32 %v1258, 0.0
    %v1265 = vmax.f32 %v1260, 0.0
    %v1266 = vxor.u32 %v1264, 2147483648
    %v1267 = vxor.u32 %v1265, 2147483648
    %v1268 = vmul.f32 %v1266, 1.442695
    %v1269 = vpow.pop %v1268
    %v1270 = vmul.f32 %v1267, 1.442695
    %v1271 = vpow.pop %v1270
    %v1272 = vadd.f32 %v1269, 1.0
    %v1273 = vadd.f32 %v1271, 1.0
    %v1274 = vrcp.pop %v1272
    %v1275 = vmul.f32 1.0, %v1274
    %v1276 = vrcp.pop %v1273
    %v1277 = vmul.f32 1.0, %v1276
    %v1278 = vmul.f32 %v1275, %v1016
    %v1279 = vmul.f32 %v1277, %v1017
    %v1280 = vadd.f32 %v697, %v1278
    %v1281 = vadd.f32 %v697, %v1279
    %v1282 = vpack.c.bf16 %v1280, %v1280
    %v1283 = vpack.c.bf16 %v1281, %v1281
    %v1284 = vld [vmem:[#allocation14] sm:$0xff]
    %v1285 = vld [vmem:[#allocation14 + $0x8] sm:$0xff]
    %v1286 = vld [vmem:[#allocation14 + $0x10] sm:$0xff]
    %v1287 = vld [vmem:[#allocation14 + $0x18] sm:$0xff]
    %v1288 = vld [vmem:[#allocation14 + $0x20] sm:$0xff]
    %v1289 = vld [vmem:[#allocation14 + $0x28] sm:$0xff]
    %v1290 = vld [vmem:[#allocation14 + $0x30] sm:$0xff]
    %v1291 = vld [vmem:[#allocation14 + $0x38] sm:$0xff]
    %v1292 = vld [vmem:[#allocation14 + $0x40] sm:$0xff]
    %v1293 = vld [vmem:[#allocation14 + $0x48] sm:$0xff]
    %v1294 = vld [vmem:[#allocation14 + $0x50] sm:$0xff]
    %v1295 = vld [vmem:[#allocation14 + $0x58] sm:$0xff]
    %v1296 = vld [vmem:[#allocation14 + $0x60] sm:$0xff]
    %v1297 = vld [vmem:[#allocation14 + $0x68] sm:$0xff]
    %v1298 = vld [vmem:[#allocation14 + $0x70] sm:$0xff]
    %v1299 = vld [vmem:[#allocation14 + $0x78] sm:$0xff]
    %v1300 = vld [vmem:[#allocation14 + $0x80] sm:$0xff]
    %v1301 = vld [vmem:[#allocation14 + $0x88] sm:$0xff]
    %v1302 = vld [vmem:[#allocation14 + $0x90] sm:$0xff]
    %v1303 = vld [vmem:[#allocation14 + $0x98] sm:$0xff]
    %v1304 = vld [vmem:[#allocation14 + $0xa0] sm:$0xff]
    %v1305 = vld [vmem:[#allocation14 + $0xa8] sm:$0xff]
    %v1306 = vld [vmem:[#allocation14 + $0xb0] sm:$0xff]
    %v1307 = vld [vmem:[#allocation14 + $0xb8] sm:$0xff]
    %v1308 = vld [vmem:[#allocation14 + $0xc0] sm:$0xff]
    %v1309 = vld [vmem:[#allocation14 + $0xc8] sm:$0xff]
    %v1310 = vld [vmem:[#allocation14 + $0xd0] sm:$0xff]
    %v1311 = vld [vmem:[#allocation14 + $0xd8] sm:$0xff]
    %v1312 = vld [vmem:[#allocation14 + $0xe0] sm:$0xff]
    %v1313 = vld [vmem:[#allocation14 + $0xe8] sm:$0xff]
    %v1314 = vld [vmem:[#allocation14 + $0xf0] sm:$0xff]
    %v1315 = vld [vmem:[#allocation14 + $0xf8] sm:$0xff]
    %v1317 = vlaneseq
    %v1318 = vshrl.u32 %v1317, 7
    %v1319 = vsub.s32 0, %v1318
    %v1320 = vrot.slane %v174, %v1319
    %v1321 = vlaneseq
    %v1322 = vshrl.u32 %v1321, 7
    %v1323 = vsub.s32 1, %v1322
    %v1324 = vrot.slane %v174, %v1323
    %v1359 = vunpack.c.l.b16 %v1284
    %v1360 = vunpack.c.h.b16 %v1284
    %v1361 = vunpack.c.l.b16 %v1285
    %v1362 = vunpack.c.h.b16 %v1285
    %v1363 = vunpack.c.l.b16 %v1286
    %v1364 = vunpack.c.h.b16 %v1286
    %v1365 = vunpack.c.l.b16 %v1287
    %v1366 = vunpack.c.h.b16 %v1287
    %v1367 = vunpack.c.l.b16 %v1288
    %v1368 = vunpack.c.h.b16 %v1288
    %v1369 = vunpack.c.l.b16 %v1289
    %v1370 = vunpack.c.h.b16 %v1289
    %v1371 = vunpack.c.l.b16 %v1290
    %v1372 = vunpack.c.h.b16 %v1290
    %v1373 = vunpack.c.l.b16 %v1291
    %v1374 = vunpack.c.h.b16 %v1291
    %v1375 = vunpack.c.l.b16 %v1292
    %v1376 = vunpack.c.h.b16 %v1292
    %v1377 = vunpack.c.l.b16 %v1293
    %v1378 = vunpack.c.h.b16 %v1293
    %v1379 = vunpack.c.l.b16 %v1294
    %v1380 = vunpack.c.h.b16 %v1294
    %v1381 = vunpack.c.l.b16 %v1295
    %v1382 = vunpack.c.h.b16 %v1295
    %v1383 = vunpack.c.l.b16 %v1296
    %v1384 = vunpack.c.h.b16 %v1296
    %v1385 = vunpack.c.l.b16 %v1297
    %v1386 = vunpack.c.h.b16 %v1297
    %v1387 = vunpack.c.l.b16 %v1298
    %v1388 = vunpack.c.h.b16 %v1298
    %v1389 = vunpack.c.l.b16 %v1299
    %v1390 = vunpack.c.h.b16 %v1299
    %v1391 = vunpack.c.l.b16 %v1300
    %v1392 = vunpack.c.h.b16 %v1300
    %v1393 = vunpack.c.l.b16 %v1301
    %v1394 = vunpack.c.h.b16 %v1301
    %v1395 = vunpack.c.l.b16 %v1302
    %v1396 = vunpack.c.h.b16 %v1302
    %v1397 = vunpack.c.l.b16 %v1303
    %v1398 = vunpack.c.h.b16 %v1303
    %v1399 = vunpack.c.l.b16 %v1304
    %v1400 = vunpack.c.h.b16 %v1304
    %v1401 = vunpack.c.l.b16 %v1305
    %v1402 = vunpack.c.h.b16 %v1305
    %v1403 = vunpack.c.l.b16 %v1306
    %v1404 = vunpack.c.h.b16 %v1306
    %v1405 = vunpack.c.l.b16 %v1307
    %v1406 = vunpack.c.h.b16 %v1307
    %v1407 = vunpack.c.l.b16 %v1308
    %v1408 = vunpack.c.h.b16 %v1308
    %v1409 = vunpack.c.l.b16 %v1309
    %v1410 = vunpack.c.h.b16 %v1309
    %v1411 = vunpack.c.l.b16 %v1310
    %v1412 = vunpack.c.h.b16 %v1310
    %v1413 = vunpack.c.l.b16 %v1311
    %v1414 = vunpack.c.h.b16 %v1311
    %v1415 = vunpack.c.l.b16 %v1312
    %v1416 = vunpack.c.h.b16 %v1312
    %v1417 = vunpack.c.l.b16 %v1313
    %v1418 = vunpack.c.h.b16 %v1313
    %v1419 = vunpack.c.l.b16 %v1314
    %v1420 = vunpack.c.h.b16 %v1314
    %v1421 = vunpack.c.l.b16 %v1315
    %v1422 = vunpack.c.h.b16 %v1315
    %v1423 = vpack.c.b16 %v1361, %v1359
    %v1424 = vpack.c.b16 %v1362, %v1360
    %v1425 = vpack.c.b16 %v1365, %v1363
    %v1426 = vpack.c.b16 %v1366, %v1364
    %v1427 = vpack.c.b16 %v1369, %v1367
    %v1428 = vpack.c.b16 %v1370, %v1368
    %v1429 = vpack.c.b16 %v1373, %v1371
    %v1430 = vpack.c.b16 %v1374, %v1372
    %v1431 = vpack.c.b16 %v1377, %v1375
    %v1432 = vpack.c.b16 %v1378, %v1376
    %v1433 = vpack.c.b16 %v1381, %v1379
    %v1434 = vpack.c.b16 %v1382, %v1380
    %v1435 = vpack.c.b16 %v1385, %v1383
    %v1436 = vpack.c.b16 %v1386, %v1384
    %v1437 = vpack.c.b16 %v1389, %v1387
    %v1438 = vpack.c.b16 %v1390, %v1388
    %v1439 = vpack.c.b16 %v1393, %v1391
    %v1440 = vpack.c.b16 %v1394, %v1392
    %v1441 = vpack.c.b16 %v1397, %v1395
    %v1442 = vpack.c.b16 %v1398, %v1396
    %v1443 = vpack.c.b16 %v1401, %v1399
    %v1444 = vpack.c.b16 %v1402, %v1400
    %v1445 = vpack.c.b16 %v1405, %v1403
    %v1446 = vpack.c.b16 %v1406, %v1404
    %v1447 = vpack.c.b16 %v1409, %v1407
    %v1448 = vpack.c.b16 %v1410, %v1408
    %v1449 = vpack.c.b16 %v1413, %v1411
    %v1450 = vpack.c.b16 %v1414, %v1412
    %v1451 = vpack.c.b16 %v1417, %v1415
    %v1452 = vpack.c.b16 %v1418, %v1416
    %v1453 = vpack.c.b16 %v1421, %v1419
    %v1454 = vpack.c.b16 %v1422, %v1420
    %1487 = vmatprep.subr.bf16.mxu0 %v1424
    %1488 = vmatpush1.bf16.msra.mxu0 %v1423
    %1489 = vmatprep.subr.bf16.mxu0 %v1426
    %1490 = vmatpush1.bf16.msra.mxu0 %v1425
    %1491 = vmatprep.subr.bf16.mxu0 %v1428
    %1492 = vmatpush1.bf16.msra.mxu0 %v1427
    %1493 = vmatprep.subr.bf16.mxu0 %v1430
    %1494 = vmatpush1.bf16.msra.mxu0 %v1429
    %1495 = vmatprep.subr.bf16.mxu0 %v1432
    %1496 = vmatpush1.bf16.msra.mxu0 %v1431
    %1497 = vmatprep.subr.bf16.mxu0 %v1434
    %1498 = vmatpush1.bf16.msra.mxu0 %v1433
    %1499 = vmatprep.subr.bf16.mxu0 %v1436
    %1500 = vmatpush1.bf16.msra.mxu0 %v1435
    %1501 = vmatprep.subr.bf16.mxu0 %v1438
    %1502 = vmatpush1.bf16.msra.mxu0 %v1437
    %1503 = vmatprep.subr.bf16.mxu0 %v1440
    %1504 = vmatpush1.bf16.msra.mxu0 %v1439
    %1505 = vmatprep.subr.bf16.mxu0 %v1442
    %1506 = vmatpush1.bf16.msra.mxu0 %v1441
    %1507 = vmatprep.subr.bf16.mxu0 %v1444
    %1508 = vmatpush1.bf16.msra.mxu0 %v1443
    %1509 = vmatprep.subr.bf16.mxu0 %v1446
    %1510 = vmatpush1.bf16.msra.mxu0 %v1445
    %1511 = vmatprep.subr.bf16.mxu0 %v1448
    %1512 = vmatpush1.bf16.msra.mxu0 %v1447
    %1513 = vmatprep.subr.bf16.mxu0 %v1450
    %1514 = vmatpush1.bf16.msra.mxu0 %v1449
    %1515 = vmatprep.subr.bf16.mxu0 %v1452
    %1516 = vmatpush1.bf16.msra.mxu0 %v1451
    %1517 = vmatprep.subr.bf16.mxu0 %v1454
    %1518 = vmatpush1.bf16.msra.mxu0 %v1453
    %1519 = vmatprep.mubr.bf16.mxu0 %v1283
    %1520 = vmatmul.mubr.bf16.gmra.mrb[0].mxu0 %v1282
    %v1521 = vpop.f32.mrb[0].mxu0
    %v1522 = vadd.f32 %v1320, %v1521
    %v1523 = vpop.f32.mrb[0].mxu0
    %v1524 = vadd.f32 %v1324, %v1523
    %v1525 = vpop.f32.mrb[0].mxu0
    %v1526 = vpop.f32.mrb[0].mxu0
    %1527 = vdwg.mxu0
    %v1528 = vmul.f32 %v1522, 1.442695
    %v1529 = vpow.pop %v1528
    %v1530 = vmul.f32 %v164, %v1529
    %v1531 = vadd.f32 %v1530, %v1524
    %1532 = vst.msk [vmem:[%s10] sm:$0xff] %vm162, %v1531
    // Predicated region
    $region82: #{invertible_nn_forward.1} parent=1 // pred_check
      _
    $region83: #{invertible_nn_forward.1} parent=1 // pred_check_branch
      %1534 = sbr.rel (0) target = $region85
    $region84: #{invertible_nn_forward.1} parent=1 // pred_region
      _
    $region85: #{invertible_nn_forward.1} parent=1 // pred_fallthru
      _
    // Predicated region
    $region86: #{invertible_nn_forward.1} parent=1 // pred_check
      _
    $region87: #{invertible_nn_forward.1} parent=1 // pred_check_branch
      %1536 = sbr.rel (0) target = $region89
    $region88: #{invertible_nn_forward.1} parent=1 // pred_region
      _
    $region89: #{invertible_nn_forward.1} parent=1 // pred_fallthru
      _
    %1537 = vsyncpa [#allocation4], 1
    %1538 = vsyncpa [#allocation6], 1
    %1539 = vsyncpa [#allocation9], 1
    %1540 = vsyncpa [#allocation12], 1
    %1541 = vsyncpa [#allocation15], 1

</llo_original>
